<compile_context>
chip_gen: v7x
topology: tpu7x:2x2x1
jax: 0.10.0
libtpu: 0.0.40
codegen_flags: <defaults>
</compile_context>

<pallas_src>
import functools

import jax
import jax.numpy as jnp
from jax.experimental import pallas as pl
from jax.experimental.pallas import tpu as pltpu


# ------------------------------ Pallas kernel ------------------------------- #

def make_tc_lstm_kernel(B, H, Tx, Ty, Ta, num_layers):
    """Fused two-direction TC-LSTM kernel (static shapes via closure)."""
    Tmax, Tmin = max(Tx, Ty), min(Tx, Ty)
    G = 8 * H                      # both directions' gates, interleaved

    def kernel(*refs):
        (xl_ref, xr_ref, a_ref, el_ref, er_ref, ae_ref,
         b0_ref, whh0_ref) = refs[:8]
        pos = 8
        extra = []
        for _ in range(num_layers - 1):
            extra.append(tuple(refs[pos:pos + 3]))
            pos += 3
        wfc_ref, bfc_ref, out_ref = refs[pos], refs[pos + 1], refs[pos + 2]

        f32, bf16 = jnp.float32, jnp.bfloat16
        V = el_ref.shape[0]        # padded vocab size

        def onehot(tok_ref, rows, dtype):
            lanes = jax.lax.broadcasted_iota(jnp.int32, (rows, V), 1)
            return jnp.where(tok_ref[...] == lanes, 1.0, 0.0).astype(dtype)

        # ---- embedding "gathers" as one-hot matmuls (XLA glue fused in) ----
        oh_l = onehot(xl_ref, Tmax * B, bf16)
        oh_r = onehot(xr_ref, Tmax * B, bf16)
        gx = (jnp.dot(oh_l, el_ref[...], preferred_element_type=f32)
              + jnp.dot(oh_r, er_ref[...], preferred_element_type=f32))  # (Tmax*B, 8H)

        # Aspect mean folded into the gate bias:  b + mean_t(emb[a_t]) @ W_ia.
        oh_a = onehot(a_ref, Ta * B, f32)
        a_cnt = oh_a[0:B, :]
        for t in range(1, Ta):
            a_cnt = a_cnt + oh_a[t * B:(t + 1) * B, :]
        b_aug = (b0_ref[...]
                 + jnp.dot(a_cnt, ae_ref[...],
                           preferred_element_type=f32) * (1.0 / Ta))      # (B, 8H)

        # ---- hoisted activation constants: sigmoid(x) = 0.5*tanh(0.5x)+0.5 ----
        lane = jax.lax.broadcasted_iota(jnp.int32, (B, G), 1)
        is_g = jnp.logical_and(lane >= 4 * H, lane < 6 * H)   # cell-candidate lanes
        scale = jnp.where(is_g, 1.0, 0.5)
        offs = jnp.where(is_g, 0.0, 0.5)

        if Tx != Ty:               # lanes of the direction still running in the tail
            left_lane = jax.lax.broadcasted_iota(jnp.int32, (B, 2 * H), 1) < H
            keep = left_lane if Tx > Ty else jnp.logical_not(left_lane)

        def recur(gxb_t, whh_bf, collect):
            h = jnp.zeros((B, 2 * H), f32)
            c = jnp.zeros((B, 2 * H), f32)
            hs = []
            for t in range(Tmax):          # static unroll: h/c live in vregs
                z = gxb_t[t] + jnp.dot(h.astype(bf16), whh_bf,
                                       preferred_element_type=f32)        # (B, 8H)
                act = scale * jnp.tanh(scale * z) + offs
                i_g = act[:, 0 * H:2 * H]
                f_g = act[:, 2 * H:4 * H]
                g_g = act[:, 4 * H:6 * H]
                o_g = act[:, 6 * H:8 * H]
                c_new = f_g * c + i_g * g_g
                h_new = o_g * jnp.tanh(c_new)
                if t < Tmin:
                    h, c = h_new, c_new
                else:                      # shorter direction done: freeze its lanes
                    h = jnp.where(keep, h_new, h)
                    c = jnp.where(keep, c_new, c)
                if collect:
                    hs.append(h)
            h_seq = jnp.concatenate(hs, axis=0) if collect else None
            return h, h_seq

        def add_bias(gx_full, b_add):      # per-step slices, computed off the chain
            return [gx_full[t * B:(t + 1) * B, :] + b_add for t in range(Tmax)]

        h_last, h_seq = recur(add_bias(gx, b_aug), whh0_ref[...],
                              collect=(num_layers > 1))
        for l in range(num_layers - 1):
            wih_ref, whh_ref, bl_ref = extra[l]
            gx_l = jnp.dot(h_seq.astype(bf16), wih_ref[...],
                           preferred_element_type=f32)
            h_last, h_seq = recur(add_bias(gx_l, bl_ref[...]), whh_ref[...],
                                  collect=(l < num_layers - 2))

        # Fused FC epilogue: (h_left_last + h_right_last) @ W_fc^T + b_fc
        h_sum = h_last[:, 0:H] + h_last[:, H:2 * H]
        out_ref[...] = (jnp.dot(h_sum, wfc_ref[...], preferred_element_type=f32)
                        + bfc_ref[...]).astype(out_ref.dtype)

    return kernel


# ------------------------------ weight repacking ----------------------------- #

def _place_dir(w, d, H):
    """(4H, K) torch-layout [i;f;g;o] -> (K, 8H) with this direction's gate
    blocks placed at the interleaved positions [i_l,i_r,f_l,f_r,g_l,g_r,o_l,o_r]."""
    K = w.shape[1]
    out = jnp.zeros((K, 8 * H), jnp.float32)
    for g in range(4):
        out = out.at[:, (2 * g + d) * H:(2 * g + d + 1) * H].set(
            jnp.transpose(w[g * H:(g + 1) * H, :]))
    return out


def _place_bias(b, d, H):
    out = jnp.zeros((1, 8 * H), jnp.float32)
    for g in range(4):
        out = out.at[0, (2 * g + d) * H:(2 * g + d + 1) * H].set(b[g * H:(g + 1) * H])
    return out


# ------------------------------ Pallas wrapper ------------------------------ #

def tc_lstm_forward(params, x_tok, y_tok, aspect_tok):
    emb = params["embed"]                                # (V, D)
    V, D = emb.shape
    lstml, lstmr = params["lstml"], params["lstmr"]
    num_layers = len(lstml)
    H = lstml[0][1].shape[1]                             # w_hh is (4H, H)
    B, Tx = x_tok.shape
    Ty, Ta = y_tok.shape[1], aspect_tok.shape[1]
    Tmax = max(Tx, Ty)
    C = params["fc_w"].shape[0]

    # ---- tiny int32 token prep (all float glue lives inside the kernel) ----
    def time_major(tok, T):
        if T < Tmax:                                     # pad shorter direction
            tok = jnp.concatenate(
                [tok, jnp.zeros((B, Tmax - T), tok.dtype)], axis=1)
        return jnp.transpose(tok).reshape(Tmax * B, 1)

    xl = time_major(x_tok, Tx)
    xr = time_major(y_tok, Ty)
    at = jnp.transpose(aspect_tok).reshape(Ta * B, 1)

    # ---- weight prep (constant-folded under jit: params are closure consts) ----
    V_pad = -(-V // 16) * 16                             # bf16 sublane tile = 16
    emb_pad = jnp.zeros((V_pad, D), jnp.float32).at[:V].set(emb)

    wl_ih, wl_hh, bl_ih, bl_hh = lstml[0]
    wr_ih, wr_hh, br_ih, br_hh = lstmr[0]
    # Embedding table folded into the layer-0 projections -> one-hot matmuls.
    E_l = (emb_pad @ _place_dir(wl_ih[:, :D], 0, H)).astype(jnp.bfloat16)
    E_r = (emb_pad @ _place_dir(wr_ih[:, :D], 1, H)).astype(jnp.bfloat16)
    A_emb = emb_pad @ (_place_dir(wl_ih[:, D:], 0, H)
                       + _place_dir(wr_ih[:, D:], 1, H))
    b_cat0 = _place_bias(bl_ih + bl_hh, 0, H) + _place_bias(br_ih + br_hh, 1, H)
    whh_cat0 = jnp.concatenate(
        [_place_dir(wl_hh, 0, H), _place_dir(wr_hh, 1, H)], axis=0
    ).astype(jnp.bfloat16)

    inputs = [xl, xr, at, E_l, E_r, A_emb, b_cat0, whh_cat0]
    for l in range(1, num_layers):
        wl_ih, wl_hh, bl_ih, bl_hh = lstml[l]
        wr_ih, wr_hh, br_ih, br_hh = lstmr[l]
        wih_cat = jnp.concatenate(
            [_place_dir(wl_ih, 0, H), _place_dir(wr_ih, 1, H)], axis=0
        ).astype(jnp.bfloat16)
        whh_cat = jnp.concatenate(
            [_place_dir(wl_hh, 0, H), _place_dir(wr_hh, 1, H)], axis=0
        ).astype(jnp.bfloat16)
        b_cat = _place_bias(bl_ih + bl_hh, 0, H) + _place_bias(br_ih + br_hh, 1, H)
        inputs += [wih_cat, whh_cat, b_cat]

    inputs += [jnp.transpose(params["fc_w"]), params["fc_b"].reshape(1, C)]

    kernel = make_tc_lstm_kernel(B, H, Tx, Ty, Ta, num_layers)

    # Total footprint (tokens + folded weights + live values) is a few tens of
    # KB -> single invocation, no grid, full-array VMEM blocks (safe on
    # v5e/v6e/v7x; well under every scoped-VMEM default).
    # TODO(synk): on v7x with long sequences the two directions could be split
    # across the two TensorCores; at T=8/H=32 the single-core fused recurrence
    # wins (no cross-core barrier / shared-memory round trip).
    return pl.pallas_call(
        kernel,
        out_shape=jax.ShapeDtypeStruct((B, C), jnp.float32),
        in_specs=[pl.BlockSpec(memory_space=pltpu.MemorySpace.VMEM)] * len(inputs),
        out_specs=pl.BlockSpec(memory_space=pltpu.MemorySpace.VMEM),
    )(*inputs)


# ------------------------------ Parameter init ------------------------------ #

def init_params(key, embed_num, embed_dim, hidden_size, num_layers, class_num):
    keys = jax.random.split(key, 3 + 8 * num_layers)
    ki = iter(keys)
    H = hidden_size
    k_lstm = 1.0 / jnp.sqrt(H)

    def uni(key, shape, k):
        return jax.random.uniform(key, shape, jnp.float32, -k, k)

    params = {"embed": jax.random.normal(next(ki), (embed_num, embed_dim),
                                         jnp.float32)}

    def make_lstm():
        layers = []
        for l in range(num_layers):
            in_size = 2 * embed_dim if l == 0 else H
            layers.append((
                uni(next(ki), (4 * H, in_size), k_lstm),   # weight_ih_l{l}
                uni(next(ki), (4 * H, H), k_lstm),         # weight_hh_l{l}
                uni(next(ki), (4 * H,), k_lstm),           # bias_ih_l{l}
                uni(next(ki), (4 * H,), k_lstm),           # bias_hh_l{l}
            ))
        return layers

    params["lstml"] = make_lstm()
    params["lstmr"] = make_lstm()
    params["fc_w"] = uni(next(ki), (class_num, H), k_lstm)
    params["fc_b"] = uni(next(ki), (class_num,), k_lstm)
    return params


# ------------------------------ Pure-JAX reference -------------------------- #

def lstm_ref(seq_btf, layer_weights):
    h_seq = seq_btf
    for (w_ih, w_hh, b_ih, b_hh) in layer_weights:
        B, T, _ = h_seq.shape
        H = w_hh.shape[1]

        def step(carry, x_t):
            h, c = carry
            gates = x_t @ w_ih.T + h @ w_hh.T + b_ih + b_hh
            i, f, g, o = jnp.split(gates, 4, axis=-1)
            c = jax.nn.sigmoid(f) * c + jax.nn.sigmoid(i) * jnp.tanh(g)
            h = jax.nn.sigmoid(o) * jnp.tanh(c)
            return (h, c), h

        init = (jnp.zeros((B, H), jnp.float32), jnp.zeros((B, H), jnp.float32))
        _, hs = jax.lax.scan(step, init, jnp.transpose(h_seq, (1, 0, 2)))
        h_seq = jnp.transpose(hs, (1, 0, 2))
    return h_seq[:, -1, :]


def tc_lstm_ref(params, x_tok, y_tok, aspect_tok):
    emb = params["embed"]
    x, y, a = emb[x_tok], emb[y_tok], emb[aspect_tok]
    a_mean = a.sum(axis=1) / a.shape[1]

    def cat(seq):
        B, T, D = seq.shape
        return jnp.concatenate(
            [seq, jnp.broadcast_to(a_mean[:, None, :], (B, T, D))], axis=2)

    hl = lstm_ref(cat(x), params["lstml"])
    hr = lstm_ref(cat(y), params["lstmr"])
    return (hl + hr) @ params["fc_w"].T + params["fc_b"]


# ----------------------------------- Main ----------------------------------- #

if __name__ == "__main__":
    # args: embed_num=50, embed_dim=16, hidden_size=32, num_layers=1,
    #       class_num=3, dropout unused in forward, static=False.
    embed_num, embed_dim, hidden_size, num_layers, class_num = 50, 16, 32, 1, 3
    B, Tx, Ty, Ta = 2, 8, 8, 3

    key = jax.random.PRNGKey(0)
    k_par, k_x, k_y, k_a = jax.random.split(key, 4)
    params = init_params(k_par, embed_num, embed_dim, hidden_size,
                         num_layers, class_num)

    x_tok = jax.random.randint(k_x, (B, Tx), 0, embed_num, jnp.int32)
    y_tok = jax.random.randint(k_y, (B, Ty), 0, embed_num, jnp.int32)
    a_tok = jax.random.randint(k_a, (B, Ta), 0, embed_num, jnp.int32)

    fwd = jax.jit(functools.partial(tc_lstm_forward, params))
    out = jax.block_until_ready(fwd(x_tok, y_tok, a_tok))

    ref = tc_lstm_ref(params, x_tok, y_tok, a_tok)
    assert out.shape == (B, class_num)
    # bf16 MXU operands with f32 accumulation sit comfortably inside 1e-2.
    assert jnp.allclose(out, ref, rtol=1e-2, atol=1e-2), (out, ref)

    print("KERNEL_OK")
</pallas_src>

<mosaic_0001>
module attributes {stable_mosaic.version = 11 : i64} {
  func.func @kernel(%arg0: memref<16x1xi32, #tpu.memory_space<vmem>>, %arg1: memref<16x1xi32, #tpu.memory_space<vmem>>, %arg2: memref<6x1xi32, #tpu.memory_space<vmem>>, %arg3: memref<64x256xbf16, #tpu.memory_space<vmem>>, %arg4: memref<64x256xbf16, #tpu.memory_space<vmem>>, %arg5: memref<64x256xf32, #tpu.memory_space<vmem>>, %arg6: memref<1x256xf32, #tpu.memory_space<vmem>>, %arg7: memref<64x256xbf16, #tpu.memory_space<vmem>>, %arg8: memref<32x3xf32, #tpu.memory_space<vmem>>, %arg9: memref<1x3xf32, #tpu.memory_space<vmem>>, %arg10: memref<2x3xf32, #tpu.memory_space<vmem>>) attributes {dimension_semantics = [], scalar_prefetch = 0 : i64, scratch_operands = 0 : i64, tpu.core_type = #tpu.core_type<tc>} {
    %0 = tpu.iota {dimensions = array<i32: 1>} : vector<16x64xi32>
    %c0 = arith.constant 0 : index
    %c0_0 = arith.constant 0 : index
    %1 = vector.load %arg0[%c0, %c0_0] : memref<16x1xi32, #tpu.memory_space<vmem>>, vector<16x1xi32>
    %2 = vector.broadcast %1 : vector<16x1xi32> to vector<16x64xi32>
    %3 = arith.cmpi eq, %2, %0 : vector<16x64xi32>
    %cst = arith.constant 1.000000e+00 : f32
    %cst_1 = arith.constant 0.000000e+00 : f32
    %4 = vector.broadcast %cst : f32 to vector<16x64xf32>
    %5 = vector.broadcast %cst_1 : f32 to vector<16x64xf32>
    %6 = arith.select %3, %4, %5 : vector<16x64xi1>, vector<16x64xf32>
    %7 = arith.truncf %6 : vector<16x64xf32> to vector<16x64xbf16>
    %8 = tpu.iota {dimensions = array<i32: 1>} : vector<16x64xi32>
    %c0_2 = arith.constant 0 : index
    %c0_3 = arith.constant 0 : index
    %9 = vector.load %arg1[%c0_2, %c0_3] : memref<16x1xi32, #tpu.memory_space<vmem>>, vector<16x1xi32>
    %10 = vector.broadcast %9 : vector<16x1xi32> to vector<16x64xi32>
    %11 = arith.cmpi eq, %10, %8 : vector<16x64xi32>
    %cst_4 = arith.constant 1.000000e+00 : f32
    %cst_5 = arith.constant 0.000000e+00 : f32
    %12 = vector.broadcast %cst_4 : f32 to vector<16x64xf32>
    %13 = vector.broadcast %cst_5 : f32 to vector<16x64xf32>
    %14 = arith.select %11, %12, %13 : vector<16x64xi1>, vector<16x64xf32>
    %15 = arith.truncf %14 : vector<16x64xf32> to vector<16x64xbf16>
    %c0_6 = arith.constant 0 : index
    %c0_7 = arith.constant 0 : index
    %16 = vector.load %arg3[%c0_6, %c0_7] : memref<64x256xbf16, #tpu.memory_space<vmem>>, vector<64x256xbf16>
    %cst_8 = arith.constant dense<0.000000e+00> : vector<16x256xf32>
    %17 = tpu.matmul %7, %16, %cst_8 {dimension_numbers = #tpu.dot_dimension_numbers<[1], [0], [0], [1], [0, 0, 1, 1], [], []>} : vector<16x64xbf16>, vector<64x256xbf16>, vector<16x256xf32> -> vector<16x256xf32>
    %c0_9 = arith.constant 0 : index
    %c0_10 = arith.constant 0 : index
    %18 = vector.load %arg4[%c0_9, %c0_10] : memref<64x256xbf16, #tpu.memory_space<vmem>>, vector<64x256xbf16>
    %cst_11 = arith.constant dense<0.000000e+00> : vector<16x256xf32>
    %19 = tpu.matmul %15, %18, %cst_11 {dimension_numbers = #tpu.dot_dimension_numbers<[1], [0], [0], [1], [0, 0, 1, 1], [], []>} : vector<16x64xbf16>, vector<64x256xbf16>, vector<16x256xf32> -> vector<16x256xf32>
    %20 = arith.addf %17, %19 : vector<16x256xf32>
    %21 = tpu.iota {dimensions = array<i32: 1>} : vector<6x64xi32>
    %c0_12 = arith.constant 0 : index
    %c0_13 = arith.constant 0 : index
    %22 = vector.load %arg2[%c0_12, %c0_13] : memref<6x1xi32, #tpu.memory_space<vmem>>, vector<6x1xi32>
    %23 = vector.broadcast %22 : vector<6x1xi32> to vector<6x64xi32>
    %24 = arith.cmpi eq, %23, %21 : vector<6x64xi32>
    %cst_14 = arith.constant 1.000000e+00 : f32
    %cst_15 = arith.constant 0.000000e+00 : f32
    %25 = vector.broadcast %cst_14 : f32 to vector<6x64xf32>
    %26 = vector.broadcast %cst_15 : f32 to vector<6x64xf32>
    %27 = arith.select %24, %25, %26 : vector<6x64xi1>, vector<6x64xf32>
    %28 = vector.extract_strided_slice %27 {offsets = [0, 0], sizes = [2, 64], strides = [1, 1]} : vector<6x64xf32> to vector<2x64xf32>
    %29 = vector.extract_strided_slice %27 {offsets = [2, 0], sizes = [2, 64], strides = [1, 1]} : vector<6x64xf32> to vector<2x64xf32>
    %30 = arith.addf %28, %29 : vector<2x64xf32>
    %31 = vector.extract_strided_slice %27 {offsets = [4, 0], sizes = [2, 64], strides = [1, 1]} : vector<6x64xf32> to vector<2x64xf32>
    %32 = arith.addf %30, %31 : vector<2x64xf32>
    %c0_16 = arith.constant 0 : index
    %c0_17 = arith.constant 0 : index
    %33 = vector.load %arg6[%c0_16, %c0_17] : memref<1x256xf32, #tpu.memory_space<vmem>>, vector<1x256xf32>
    %c0_18 = arith.constant 0 : index
    %c0_19 = arith.constant 0 : index
    %34 = vector.load %arg5[%c0_18, %c0_19] : memref<64x256xf32, #tpu.memory_space<vmem>>, vector<64x256xf32>
    %cst_20 = arith.constant dense<0.000000e+00> : vector<2x256xf32>
    %35 = tpu.matmul %32, %34, %cst_20 {dimension_numbers = #tpu.dot_dimension_numbers<[1], [0], [0], [1], [0, 0, 1, 1], [], []>} : vector<2x64xf32>, vector<64x256xf32>, vector<2x256xf32> -> vector<2x256xf32>
    %cst_21 = arith.constant 0.333333343 : f32
    %36 = vector.broadcast %cst_21 : f32 to vector<2x256xf32>
    %37 = arith.mulf %35, %36 : vector<2x256xf32>
    %38 = vector.broadcast %33 : vector<1x256xf32> to vector<2x256xf32>
    %39 = arith.addf %38, %37 : vector<2x256xf32>
    %40 = tpu.iota {dimensions = array<i32: 1>} : vector<2x256xi32>
    %c128_i32 = arith.constant 128 : i32
    %41 = vector.broadcast %c128_i32 : i32 to vector<2x256xi32>
    %42 = arith.cmpi sge, %40, %41 : vector<2x256xi32>
    %c192_i32 = arith.constant 192 : i32
    %43 = vector.broadcast %c192_i32 : i32 to vector<2x256xi32>
    %44 = arith.cmpi slt, %40, %43 : vector<2x256xi32>
    %45 = arith.andi %42, %44 : vector<2x256xi1>
    %cst_22 = arith.constant 1.000000e+00 : f32
    %cst_23 = arith.constant 5.000000e-01 : f32
    %46 = vector.broadcast %cst_22 : f32 to vector<2x256xf32>
    %47 = vector.broadcast %cst_23 : f32 to vector<2x256xf32>
    %48 = arith.select %45, %46, %47 : vector<2x256xi1>, vector<2x256xf32>
    %cst_24 = arith.constant 0.000000e+00 : f32
    %cst_25 = arith.constant 5.000000e-01 : f32
    %49 = vector.broadcast %cst_24 : f32 to vector<2x256xf32>
    %50 = vector.broadcast %cst_25 : f32 to vector<2x256xf32>
    %51 = arith.select %45, %49, %50 : vector<2x256xi1>, vector<2x256xf32>
    %52 = vector.extract_strided_slice %20 {offsets = [0, 0], sizes = [2, 256], strides = [1, 1]} : vector<16x256xf32> to vector<2x256xf32>
    %53 = arith.addf %52, %39 : vector<2x256xf32>
    %54 = vector.extract_strided_slice %20 {offsets = [2, 0], sizes = [2, 256], strides = [1, 1]} : vector<16x256xf32> to vector<2x256xf32>
    %55 = arith.addf %54, %39 : vector<2x256xf32>
    %56 = vector.extract_strided_slice %20 {offsets = [4, 0], sizes = [2, 256], strides = [1, 1]} : vector<16x256xf32> to vector<2x256xf32>
    %57 = arith.addf %56, %39 : vector<2x256xf32>
    %58 = vector.extract_strided_slice %20 {offsets = [6, 0], sizes = [2, 256], strides = [1, 1]} : vector<16x256xf32> to vector<2x256xf32>
    %59 = arith.addf %58, %39 : vector<2x256xf32>
    %60 = vector.extract_strided_slice %20 {offsets = [8, 0], sizes = [2, 256], strides = [1, 1]} : vector<16x256xf32> to vector<2x256xf32>
    %61 = arith.addf %60, %39 : vector<2x256xf32>
    %62 = vector.extract_strided_slice %20 {offsets = [10, 0], sizes = [2, 256], strides = [1, 1]} : vector<16x256xf32> to vector<2x256xf32>
    %63 = arith.addf %62, %39 : vector<2x256xf32>
    %64 = vector.extract_strided_slice %20 {offsets = [12, 0], sizes = [2, 256], strides = [1, 1]} : vector<16x256xf32> to vector<2x256xf32>
    %65 = arith.addf %64, %39 : vector<2x256xf32>
    %66 = vector.extract_strided_slice %20 {offsets = [14, 0], sizes = [2, 256], strides = [1, 1]} : vector<16x256xf32> to vector<2x256xf32>
    %67 = arith.addf %66, %39 : vector<2x256xf32>
    %c0_26 = arith.constant 0 : index
    %c0_27 = arith.constant 0 : index
    %68 = vector.load %arg7[%c0_26, %c0_27] : memref<64x256xbf16, #tpu.memory_space<vmem>>, vector<64x256xbf16>
    %cst_28 = arith.constant 0.000000e+00 : f32
    %69 = vector.broadcast %cst_28 : f32 to vector<2x64xf32>
    %cst_29 = arith.constant 0.000000e+00 : f32
    %70 = vector.broadcast %cst_29 : f32 to vector<2x64xf32>
    %71 = arith.truncf %69 : vector<2x64xf32> to vector<2x64xbf16>
    %cst_30 = arith.constant dense<0.000000e+00> : vector<2x256xf32>
    %72 = tpu.matmul %71, %68, %cst_30 {dimension_numbers = #tpu.dot_dimension_numbers<[1], [0], [0], [1], [0, 0, 1, 1], [], []>} : vector<2x64xbf16>, vector<64x256xbf16>, vector<2x256xf32> -> vector<2x256xf32>
    %73 = arith.addf %53, %72 : vector<2x256xf32>
    %74 = arith.mulf %48, %73 : vector<2x256xf32>
    %75 = math.tanh %74 : vector<2x256xf32>
    %76 = arith.mulf %48, %75 : vector<2x256xf32>
    %77 = arith.addf %76, %51 : vector<2x256xf32>
    %78 = vector.extract_strided_slice %77 {offsets = [0, 0], sizes = [2, 64], strides = [1, 1]} : vector<2x256xf32> to vector<2x64xf32>
    %79 = vector.extract_strided_slice %77 {offsets = [0, 64], sizes = [2, 64], strides = [1, 1]} : vector<2x256xf32> to vector<2x64xf32>
    %80 = vector.extract_strided_slice %77 {offsets = [0, 128], sizes = [2, 64], strides = [1, 1]} : vector<2x256xf32> to vector<2x64xf32>
    %81 = vector.extract_strided_slice %77 {offsets = [0, 192], sizes = [2, 64], strides = [1, 1]} : vector<2x256xf32> to vector<2x64xf32>
    %82 = arith.mulf %79, %70 : vector<2x64xf32>
    %83 = arith.mulf %78, %80 : vector<2x64xf32>
    %84 = arith.addf %82, %83 : vector<2x64xf32>
    %85 = math.tanh %84 : vector<2x64xf32>
    %86 = arith.mulf %81, %85 : vector<2x64xf32>
    %87 = arith.truncf %86 : vector<2x64xf32> to vector<2x64xbf16>
    %cst_31 = arith.constant dense<0.000000e+00> : vector<2x256xf32>
    %88 = tpu.matmul %87, %68, %cst_31 {dimension_numbers = #tpu.dot_dimension_numbers<[1], [0], [0], [1], [0, 0, 1, 1], [], []>} : vector<2x64xbf16>, vector<64x256xbf16>, vector<2x256xf32> -> vector<2x256xf32>
    %89 = arith.addf %55, %88 : vector<2x256xf32>
    %90 = arith.mulf %48, %89 : vector<2x256xf32>
    %91 = math.tanh %90 : vector<2x256xf32>
    %92 = arith.mulf %48, %91 : vector<2x256xf32>
    %93 = arith.addf %92, %51 : vector<2x256xf32>
    %94 = vector.extract_strided_slice %93 {offsets = [0, 0], sizes = [2, 64], strides = [1, 1]} : vector<2x256xf32> to vector<2x64xf32>
    %95 = vector.extract_strided_slice %93 {offsets = [0, 64], sizes = [2, 64], strides = [1, 1]} : vector<2x256xf32> to vector<2x64xf32>
    %96 = vector.extract_strided_slice %93 {offsets = [0, 128], sizes = [2, 64], strides = [1, 1]} : vector<2x256xf32> to vector<2x64xf32>
    %97 = vector.extract_strided_slice %93 {offsets = [0, 192], sizes = [2, 64], strides = [1, 1]} : vector<2x256xf32> to vector<2x64xf32>
    %98 = arith.mulf %95, %84 : vector<2x64xf32>
    %99 = arith.mulf %94, %96 : vector<2x64xf32>
    %100 = arith.addf %98, %99 : vector<2x64xf32>
    %101 = math.tanh %100 : vector<2x64xf32>
    %102 = arith.mulf %97, %101 : vector<2x64xf32>
    %103 = arith.truncf %102 : vector<2x64xf32> to vector<2x64xbf16>
    %cst_32 = arith.constant dense<0.000000e+00> : vector<2x256xf32>
    %104 = tpu.matmul %103, %68, %cst_32 {dimension_numbers = #tpu.dot_dimension_numbers<[1], [0], [0], [1], [0, 0, 1, 1], [], []>} : vector<2x64xbf16>, vector<64x256xbf16>, vector<2x256xf32> -> vector<2x256xf32>
    %105 = arith.addf %57, %104 : vector<2x256xf32>
    %106 = arith.mulf %48, %105 : vector<2x256xf32>
    %107 = math.tanh %106 : vector<2x256xf32>
    %108 = arith.mulf %48, %107 : vector<2x256xf32>
    %109 = arith.addf %108, %51 : vector<2x256xf32>
    %110 = vector.extract_strided_slice %109 {offsets = [0, 0], sizes = [2, 64], strides = [1, 1]} : vector<2x256xf32> to vector<2x64xf32>
    %111 = vector.extract_strided_slice %109 {offsets = [0, 64], sizes = [2, 64], strides = [1, 1]} : vector<2x256xf32> to vector<2x64xf32>
    %112 = vector.extract_strided_slice %109 {offsets = [0, 128], sizes = [2, 64], strides = [1, 1]} : vector<2x256xf32> to vector<2x64xf32>
    %113 = vector.extract_strided_slice %109 {offsets = [0, 192], sizes = [2, 64], strides = [1, 1]} : vector<2x256xf32> to vector<2x64xf32>
    %114 = arith.mulf %111, %100 : vector<2x64xf32>
    %115 = arith.mulf %110, %112 : vector<2x64xf32>
    %116 = arith.addf %114, %115 : vector<2x64xf32>
    %117 = math.tanh %116 : vector<2x64xf32>
    %118 = arith.mulf %113, %117 : vector<2x64xf32>
    %119 = arith.truncf %118 : vector<2x64xf32> to vector<2x64xbf16>
    %cst_33 = arith.constant dense<0.000000e+00> : vector<2x256xf32>
    %120 = tpu.matmul %119, %68, %cst_33 {dimension_numbers = #tpu.dot_dimension_numbers<[1], [0], [0], [1], [0, 0, 1, 1], [], []>} : vector<2x64xbf16>, vector<64x256xbf16>, vector<2x256xf32> -> vector<2x256xf32>
    %121 = arith.addf %59, %120 : vector<2x256xf32>
    %122 = arith.mulf %48, %121 : vector<2x256xf32>
    %123 = math.tanh %122 : vector<2x256xf32>
    %124 = arith.mulf %48, %123 : vector<2x256xf32>
    %125 = arith.addf %124, %51 : vector<2x256xf32>
    %126 = vector.extract_strided_slice %125 {offsets = [0, 0], sizes = [2, 64], strides = [1, 1]} : vector<2x256xf32> to vector<2x64xf32>
    %127 = vector.extract_strided_slice %125 {offsets = [0, 64], sizes = [2, 64], strides = [1, 1]} : vector<2x256xf32> to vector<2x64xf32>
    %128 = vector.extract_strided_slice %125 {offsets = [0, 128], sizes = [2, 64], strides = [1, 1]} : vector<2x256xf32> to vector<2x64xf32>
    %129 = vector.extract_strided_slice %125 {offsets = [0, 192], sizes = [2, 64], strides = [1, 1]} : vector<2x256xf32> to vector<2x64xf32>
    %130 = arith.mulf %127, %116 : vector<2x64xf32>
    %131 = arith.mulf %126, %128 : vector<2x64xf32>
    %132 = arith.addf %130, %131 : vector<2x64xf32>
    %133 = math.tanh %132 : vector<2x64xf32>
    %134 = arith.mulf %129, %133 : vector<2x64xf32>
    %135 = arith.truncf %134 : vector<2x64xf32> to vector<2x64xbf16>
    %cst_34 = arith.constant dense<0.000000e+00> : vector<2x256xf32>
    %136 = tpu.matmul %135, %68, %cst_34 {dimension_numbers = #tpu.dot_dimension_numbers<[1], [0], [0], [1], [0, 0, 1, 1], [], []>} : vector<2x64xbf16>, vector<64x256xbf16>, vector<2x256xf32> -> vector<2x256xf32>
    %137 = arith.addf %61, %136 : vector<2x256xf32>
    %138 = arith.mulf %48, %137 : vector<2x256xf32>
    %139 = math.tanh %138 : vector<2x256xf32>
    %140 = arith.mulf %48, %139 : vector<2x256xf32>
    %141 = arith.addf %140, %51 : vector<2x256xf32>
    %142 = vector.extract_strided_slice %141 {offsets = [0, 0], sizes = [2, 64], strides = [1, 1]} : vector<2x256xf32> to vector<2x64xf32>
    %143 = vector.extract_strided_slice %141 {offsets = [0, 64], sizes = [2, 64], strides = [1, 1]} : vector<2x256xf32> to vector<2x64xf32>
    %144 = vector.extract_strided_slice %141 {offsets = [0, 128], sizes = [2, 64], strides = [1, 1]} : vector<2x256xf32> to vector<2x64xf32>
    %145 = vector.extract_strided_slice %141 {offsets = [0, 192], sizes = [2, 64], strides = [1, 1]} : vector<2x256xf32> to vector<2x64xf32>
    %146 = arith.mulf %143, %132 : vector<2x64xf32>
    %147 = arith.mulf %142, %144 : vector<2x64xf32>
    %148 = arith.addf %146, %147 : vector<2x64xf32>
    %149 = math.tanh %148 : vector<2x64xf32>
    %150 = arith.mulf %145, %149 : vector<2x64xf32>
    %151 = arith.truncf %150 : vector<2x64xf32> to vector<2x64xbf16>
    %cst_35 = arith.constant dense<0.000000e+00> : vector<2x256xf32>
    %152 = tpu.matmul %151, %68, %cst_35 {dimension_numbers = #tpu.dot_dimension_numbers<[1], [0], [0], [1], [0, 0, 1, 1], [], []>} : vector<2x64xbf16>, vector<64x256xbf16>, vector<2x256xf32> -> vector<2x256xf32>
    %153 = arith.addf %63, %152 : vector<2x256xf32>
    %154 = arith.mulf %48, %153 : vector<2x256xf32>
    %155 = math.tanh %154 : vector<2x256xf32>
    %156 = arith.mulf %48, %155 : vector<2x256xf32>
    %157 = arith.addf %156, %51 : vector<2x256xf32>
    %158 = vector.extract_strided_slice %157 {offsets = [0, 0], sizes = [2, 64], strides = [1, 1]} : vector<2x256xf32> to vector<2x64xf32>
    %159 = vector.extract_strided_slice %157 {offsets = [0, 64], sizes = [2, 64], strides = [1, 1]} : vector<2x256xf32> to vector<2x64xf32>
    %160 = vector.extract_strided_slice %157 {offsets = [0, 128], sizes = [2, 64], strides = [1, 1]} : vector<2x256xf32> to vector<2x64xf32>
    %161 = vector.extract_strided_slice %157 {offsets = [0, 192], sizes = [2, 64], strides = [1, 1]} : vector<2x256xf32> to vector<2x64xf32>
    %162 = arith.mulf %159, %148 : vector<2x64xf32>
    %163 = arith.mulf %158, %160 : vector<2x64xf32>
    %164 = arith.addf %162, %163 : vector<2x64xf32>
    %165 = math.tanh %164 : vector<2x64xf32>
    %166 = arith.mulf %161, %165 : vector<2x64xf32>
    %167 = arith.truncf %166 : vector<2x64xf32> to vector<2x64xbf16>
    %cst_36 = arith.constant dense<0.000000e+00> : vector<2x256xf32>
    %168 = tpu.matmul %167, %68, %cst_36 {dimension_numbers = #tpu.dot_dimension_numbers<[1], [0], [0], [1], [0, 0, 1, 1], [], []>} : vector<2x64xbf16>, vector<64x256xbf16>, vector<2x256xf32> -> vector<2x256xf32>
    %169 = arith.addf %65, %168 : vector<2x256xf32>
    %170 = arith.mulf %48, %169 : vector<2x256xf32>
    %171 = math.tanh %170 : vector<2x256xf32>
    %172 = arith.mulf %48, %171 : vector<2x256xf32>
    %173 = arith.addf %172, %51 : vector<2x256xf32>
    %174 = vector.extract_strided_slice %173 {offsets = [0, 0], sizes = [2, 64], strides = [1, 1]} : vector<2x256xf32> to vector<2x64xf32>
    %175 = vector.extract_strided_slice %173 {offsets = [0, 64], sizes = [2, 64], strides = [1, 1]} : vector<2x256xf32> to vector<2x64xf32>
    %176 = vector.extract_strided_slice %173 {offsets = [0, 128], sizes = [2, 64], strides = [1, 1]} : vector<2x256xf32> to vector<2x64xf32>
    %177 = vector.extract_strided_slice %173 {offsets = [0, 192], sizes = [2, 64], strides = [1, 1]} : vector<2x256xf32> to vector<2x64xf32>
    %178 = arith.mulf %175, %164 : vector<2x64xf32>
    %179 = arith.mulf %174, %176 : vector<2x64xf32>
    %180 = arith.addf %178, %179 : vector<2x64xf32>
    %181 = math.tanh %180 : vector<2x64xf32>
    %182 = arith.mulf %177, %181 : vector<2x64xf32>
    %183 = arith.truncf %182 : vector<2x64xf32> to vector<2x64xbf16>
    %cst_37 = arith.constant dense<0.000000e+00> : vector<2x256xf32>
    %184 = tpu.matmul %183, %68, %cst_37 {dimension_numbers = #tpu.dot_dimension_numbers<[1], [0], [0], [1], [0, 0, 1, 1], [], []>} : vector<2x64xbf16>, vector<64x256xbf16>, vector<2x256xf32> -> vector<2x256xf32>
    %185 = arith.addf %67, %184 : vector<2x256xf32>
    %186 = arith.mulf %48, %185 : vector<2x256xf32>
    %187 = math.tanh %186 : vector<2x256xf32>
    %188 = arith.mulf %48, %187 : vector<2x256xf32>
    %189 = arith.addf %188, %51 : vector<2x256xf32>
    %190 = vector.extract_strided_slice %189 {offsets = [0, 0], sizes = [2, 64], strides = [1, 1]} : vector<2x256xf32> to vector<2x64xf32>
    %191 = vector.extract_strided_slice %189 {offsets = [0, 64], sizes = [2, 64], strides = [1, 1]} : vector<2x256xf32> to vector<2x64xf32>
    %192 = vector.extract_strided_slice %189 {offsets = [0, 128], sizes = [2, 64], strides = [1, 1]} : vector<2x256xf32> to vector<2x64xf32>
    %193 = vector.extract_strided_slice %189 {offsets = [0, 192], sizes = [2, 64], strides = [1, 1]} : vector<2x256xf32> to vector<2x64xf32>
    %194 = arith.mulf %191, %180 : vector<2x64xf32>
    %195 = arith.mulf %190, %192 : vector<2x64xf32>
    %196 = arith.addf %194, %195 : vector<2x64xf32>
    %197 = math.tanh %196 : vector<2x64xf32>
    %198 = arith.mulf %193, %197 : vector<2x64xf32>
    %199 = vector.extract_strided_slice %198 {offsets = [0, 0], sizes = [2, 32], strides = [1, 1]} : vector<2x64xf32> to vector<2x32xf32>
    %200 = vector.extract_strided_slice %198 {offsets = [0, 32], sizes = [2, 32], strides = [1, 1]} : vector<2x64xf32> to vector<2x32xf32>
    %201 = arith.addf %199, %200 : vector<2x32xf32>
    %c0_38 = arith.constant 0 : index
    %c0_39 = arith.constant 0 : index
    %202 = vector.load %arg8[%c0_38, %c0_39] : memref<32x3xf32, #tpu.memory_space<vmem>>, vector<32x3xf32>
    %cst_40 = arith.constant dense<0.000000e+00> : vector<2x3xf32>
    %203 = tpu.matmul %201, %202, %cst_40 {dimension_numbers = #tpu.dot_dimension_numbers<[1], [0], [0], [1], [0, 0, 1, 1], [], []>} : vector<2x32xf32>, vector<32x3xf32>, vector<2x3xf32> -> vector<2x3xf32>
    %c0_41 = arith.constant 0 : index
    %c0_42 = arith.constant 0 : index
    %204 = vector.load %arg9[%c0_41, %c0_42] : memref<1x3xf32, #tpu.memory_space<vmem>>, vector<1x3xf32>
    %205 = vector.broadcast %204 : vector<1x3xf32> to vector<2x3xf32>
    %206 = arith.addf %203, %205 : vector<2x3xf32>
    %c0_43 = arith.constant 0 : index
    %c0_44 = arith.constant 0 : index
    %207 = vector.load %arg10[%c0_43, %c0_44] : memref<2x3xf32, #tpu.memory_space<vmem>>, vector<2x3xf32>
    tpu.vector_store %arg10[%c0_43, %c0_44], %206 {strides = array<i32>} : memref<2x3xf32, #tpu.memory_space<vmem>>, vector<2x3xf32>,
    return
  }
}

</mosaic_0001>

<llo_original>
// kernel: tc_lstm_forward.1
$region0: #{tc_lstm_forward.1}
  #allocation0 [shape = 'u32[]', space=smem, size = 0x4, offset = 0x4, fixed_abs, tag = 'smem constant byte address 0x4 - core index']
  #allocation1 [shape = 'u32[144,128]{1,0:T(1,128)}', space=vmem, size = 0x12000, scoped, tag = 'internal scratch']
  %s0 = inlined_call_operand.vmem [shape: s32[16,1], index: 0, kind: input, shape index: {}]
  %s1 = inlined_call_operand.vmem [shape: s32[16,1], index: 1, kind: input, shape index: {}]
  %s2 = inlined_call_operand.vmem [shape: s32[6,1], index: 2, kind: input, shape index: {}]
  %s3 = inlined_call_operand.vmem [shape: bf16[64,256], index: 3, kind: input, shape index: {}]
  %s4 = inlined_call_operand.vmem [shape: bf16[64,256], index: 4, kind: input, shape index: {}]
  %s5 = inlined_call_operand.vmem [shape: f32[64,256], index: 5, kind: input, shape index: {}]
  %s6 = inlined_call_operand.vmem [shape: f32[1,256], index: 6, kind: input, shape index: {}]
  %s7 = inlined_call_operand.vmem [shape: bf16[64,256], index: 7, kind: input, shape index: {}]
  %s8 = inlined_call_operand.vmem [shape: f32[32,3], index: 8, kind: input, shape index: {}]
  %s9 = inlined_call_operand.vmem [shape: f32[1,3], index: 9, kind: input, shape index: {}]
  %s10 = inlined_call_operand.hbm [shape: f32[2,3], index: 10, kind: output, shape index: {}]
  %s11 = sld [smem:[#allocation0]]
  $region50: #{tc_lstm_forward.1} parent=0
    _
  %s13 = ssub.s32 1, %s11
  %s14 = scalar_select 0, %s13, %s11
  $region1: #{tc_lstm_forward.1} parent=0
    #allocation2 [shape = 'u8[1024]{0}', space=vmem, size = 0x400, scoped, tag = 'output window, operand 0, single buffered']
    #allocation3 [shape = 's32[1]{0}', space=sflag, size = 0x4, scoped, tag = 'scoped memory for tc_lstm_forward.1']
    %15 = vsyncpa [#allocation3], 0
    // Predicated region
    $region2: #{tc_lstm_forward.1} parent=1 // pred_check
      _
    $region3: #{tc_lstm_forward.1} parent=1 // pred_check_branch
      %17 = sbr.rel (0) target = $region5
    $region4: #{tc_lstm_forward.1} parent=1 // pred_region
      _
    $region5: #{tc_lstm_forward.1} parent=1 // pred_fallthru
      _
    // Predicated region
    $region6: #{tc_lstm_forward.1} parent=1 // pred_check
      _
    $region7: #{tc_lstm_forward.1} parent=1 // pred_check_branch
      %19 = sbr.rel (0) target = $region9
    $region8: #{tc_lstm_forward.1} parent=1 // pred_region
      _
    $region9: #{tc_lstm_forward.1} parent=1 // pred_fallthru
      _
    // Predicated region
    $region10: #{tc_lstm_forward.1} parent=1 // pred_check
      _
    $region11: #{tc_lstm_forward.1} parent=1 // pred_check_branch
      %21 = sbr.rel (0) target = $region13
    $region12: #{tc_lstm_forward.1} parent=1 // pred_region
      _
    $region13: #{tc_lstm_forward.1} parent=1 // pred_fallthru
      _
    // Predicated region
    $region14: #{tc_lstm_forward.1} parent=1 // pred_check
      _
    $region15: #{tc_lstm_forward.1} parent=1 // pred_check_branch
      %23 = sbr.rel (0) target = $region17
    $region16: #{tc_lstm_forward.1} parent=1 // pred_region
      _
    $region17: #{tc_lstm_forward.1} parent=1 // pred_fallthru
      _
    // Predicated region
    $region18: #{tc_lstm_forward.1} parent=1 // pred_check
      _
    $region19: #{tc_lstm_forward.1} parent=1 // pred_check_branch
      %25 = sbr.rel (0) target = $region21
    $region20: #{tc_lstm_forward.1} parent=1 // pred_region
      _
    $region21: #{tc_lstm_forward.1} parent=1 // pred_fallthru
      _
    // Predicated region
    $region22: #{tc_lstm_forward.1} parent=1 // pred_check
      _
    $region23: #{tc_lstm_forward.1} parent=1 // pred_check_branch
      %27 = sbr.rel (0) target = $region25
    $region24: #{tc_lstm_forward.1} parent=1 // pred_region
      _
    $region25: #{tc_lstm_forward.1} parent=1 // pred_fallthru
      _
    // Predicated region
    $region26: #{tc_lstm_forward.1} parent=1 // pred_check
      _
    $region27: #{tc_lstm_forward.1} parent=1 // pred_check_branch
      %29 = sbr.rel (0) target = $region29
    $region28: #{tc_lstm_forward.1} parent=1 // pred_region
      _
    $region29: #{tc_lstm_forward.1} parent=1 // pred_fallthru
      _
    // Predicated region
    $region30: #{tc_lstm_forward.1} parent=1 // pred_check
      _
    $region31: #{tc_lstm_forward.1} parent=1 // pred_check_branch
      %31 = sbr.rel (0) target = $region33
    $region32: #{tc_lstm_forward.1} parent=1 // pred_region
      _
    $region33: #{tc_lstm_forward.1} parent=1 // pred_fallthru
      _
    // Predicated region
    $region34: #{tc_lstm_forward.1} parent=1 // pred_check
      _
    $region35: #{tc_lstm_forward.1} parent=1 // pred_check_branch
      %33 = sbr.rel (0) target = $region37
    $region36: #{tc_lstm_forward.1} parent=1 // pred_region
      _
    $region37: #{tc_lstm_forward.1} parent=1 // pred_fallthru
      _
    // Predicated region
    $region38: #{tc_lstm_forward.1} parent=1 // pred_check
      _
    $region39: #{tc_lstm_forward.1} parent=1 // pred_check_branch
      %35 = sbr.rel (0) target = $region41
    $region40: #{tc_lstm_forward.1} parent=1 // pred_region
      _
    $region41: #{tc_lstm_forward.1} parent=1 // pred_fallthru
      _
    %v37 = vlaneseq
    %v38 = vand.u32 %v37, 127
    %v39 = vld [vmem:[%s0] sm:$0xff]
    %v40 = vld [vmem:[%s0 + $0x8] sm:$0xff]
    %41 = vset.pattern.permute.xlu0 0
    %42 = vperm.xlu0 %41, %v39
    %v43 = vpop.permute.xlu0 %42
    %44 = vset.pattern.permute.xlu0 0
    %45 = vperm.xlu0 %44, %v40
    %v46 = vpop.permute.xlu0 %45
    %vm47 = vcmp.eq.s32.totalorder %v43, %v38
    %vm48 = vcmp.eq.s32.totalorder %v46, %v38
    %v49 = vsel %vm47, 1.0, 0.0
    %v50 = vsel %vm48, 1.0, 0.0
    %v51 = vpack.c.bf16 %v50, %v49
    %v52 = vld [vmem:[%s1] sm:$0xff]
    %v53 = vld [vmem:[%s1 + $0x8] sm:$0xff]
    %54 = vset.pattern.permute.xlu0 0
    %55 = vperm.xlu0 %54, %v52
    %v56 = vpop.permute.xlu0 %55
    %57 = vset.pattern.permute.xlu0 0
    %58 = vperm.xlu0 %57, %v53
    %v59 = vpop.permute.xlu0 %58
    %vm60 = vcmp.eq.s32.totalorder %v56, %v38
    %vm61 = vcmp.eq.s32.totalorder %v59, %v38
    %v62 = vsel %vm60, 1.0, 0.0
    %v63 = vsel %vm61, 1.0, 0.0
    %v64 = vpack.c.bf16 %v63, %v62
    %v65 = vld [vmem:[%s3] sm:$0xff]
    %v66 = vld [vmem:[%s3 + $0x8] sm:$0xff]
    %v67 = vld [vmem:[%s3 + $0x10] sm:$0xff]
    %v68 = vld [vmem:[%s3 + $0x18] sm:$0xff]
    %v69 = vld [vmem:[%s3 + $0x20] sm:$0xff]
    %v70 = vld [vmem:[%s3 + $0x28] sm:$0xff]
    %v71 = vld [vmem:[%s3 + $0x30] sm:$0xff]
    %v72 = vld [vmem:[%s3 + $0x38] sm:$0xff]
    %v73 = vld [vmem:[%s4] sm:$0xff]
    %v74 = vld [vmem:[%s4 + $0x8] sm:$0xff]
    %v75 = vld [vmem:[%s4 + $0x10] sm:$0xff]
    %v76 = vld [vmem:[%s4 + $0x18] sm:$0xff]
    %v77 = vld [vmem:[%s4 + $0x20] sm:$0xff]
    %v78 = vld [vmem:[%s4 + $0x28] sm:$0xff]
    %v79 = vld [vmem:[%s4 + $0x30] sm:$0xff]
    %v80 = vld [vmem:[%s4 + $0x38] sm:$0xff]
    %v89 = vunpack.c.l.b16 %v73
    %v90 = vunpack.c.h.b16 %v73
    %v91 = vunpack.c.l.b16 %v74
    %v92 = vunpack.c.h.b16 %v74
    %v93 = vunpack.c.l.b16 %v75
    %v94 = vunpack.c.h.b16 %v75
    %v95 = vunpack.c.l.b16 %v76
    %v96 = vunpack.c.h.b16 %v76
    %v97 = vunpack.c.l.b16 %v77
    %v98 = vunpack.c.h.b16 %v77
    %v99 = vunpack.c.l.b16 %v78
    %v100 = vunpack.c.h.b16 %v78
    %v101 = vunpack.c.l.b16 %v79
    %v102 = vunpack.c.h.b16 %v79
    %v103 = vunpack.c.l.b16 %v80
    %v104 = vunpack.c.h.b16 %v80
    %v105 = vpack.c.b16 %v91, %v89
    %v106 = vpack.c.b16 %v92, %v90
    %v107 = vpack.c.b16 %v95, %v93
    %v108 = vpack.c.b16 %v96, %v94
    %v109 = vpack.c.b16 %v99, %v97
    %v110 = vpack.c.b16 %v100, %v98
    %v111 = vpack.c.b16 %v103, %v101
    %v112 = vpack.c.b16 %v104, %v102
    %vm121 = vcmask 523264
    %v123 = vsel %vm121, %v64, 0
    %125 = vmatprep.subr.bf16.mxu0 %v106
    %126 = vmatpush1.bf16.msra.mxu0 %v105
    %127 = vmatprep.subr.bf16.mxu0 %v108
    %128 = vmatpush1.bf16.msra.mxu0 %v107
    %129 = vmatprep.subr.bf16.mxu0 %v110
    %130 = vmatpush1.bf16.msra.mxu0 %v109
    %131 = vmatprep.subr.bf16.mxu0 %v112
    %132 = vmatpush1.bf16.msra.mxu0 %v111
    %133 = vmatprep.subr.bf16.mxu0 0
    %134 = vmatpush1.bf16.msra.mxu0 0
    %135 = vmatprep.subr.bf16.mxu0 0
    %136 = vmatpush1.bf16.msra.mxu0 0
    %137 = vmatprep.subr.bf16.mxu0 0
    %138 = vmatpush1.bf16.msra.mxu0 0
    %139 = vmatprep.subr.bf16.mxu0 0
    %140 = vmatpush1.bf16.msra.mxu0 0
    %141 = vmatprep.subr.bf16.mxu0 0
    %142 = vmatpush1.bf16.msra.mxu0 0
    %143 = vmatprep.subr.bf16.mxu0 0
    %144 = vmatpush1.bf16.msra.mxu0 0
    %145 = vmatprep.subr.bf16.mxu0 0
    %146 = vmatpush1.bf16.msra.mxu0 0
    %147 = vmatprep.subr.bf16.mxu0 0
    %148 = vmatpush1.bf16.msra.mxu0 0
    %149 = vmatprep.subr.bf16.mxu0 0
    %150 = vmatpush1.bf16.msra.mxu0 0
    %151 = vmatprep.subr.bf16.mxu0 0
    %152 = vmatpush1.bf16.msra.mxu0 0
    %153 = vmatprep.subr.bf16.mxu0 0
    %154 = vmatpush1.bf16.msra.mxu0 0
    %155 = vmatprep.subr.bf16.mxu0 0
    %156 = vmatpush1.bf16.msra.mxu0 0
    %157 = vmatprep.mubr.bf16.mxu0 0
    %158 = vmatmul.mubr.bf16.gmra.mrb[0].mxu0 %v123
    %v159 = vpop.f32.mrb[0].mxu0
    %v160 = vadd.f32 0.0, %v159
    %v161 = vpop.f32.mrb[0].mxu0
    %v162 = vadd.f32 0.0, %v161
    %v163 = vpop.f32.mrb[0].mxu0
    %v164 = vadd.f32 0.0, %v163
    %v165 = vpop.f32.mrb[0].mxu0
    %v166 = vadd.f32 0.0, %v165
    %167 = vdwg.mxu0
    %v176 = vunpack.c.l.b16 %v65
    %v177 = vunpack.c.h.b16 %v65
    %v178 = vunpack.c.l.b16 %v66
    %v179 = vunpack.c.h.b16 %v66
    %v180 = vunpack.c.l.b16 %v67
    %v181 = vunpack.c.h.b16 %v67
    %v182 = vunpack.c.l.b16 %v68
    %v183 = vunpack.c.h.b16 %v68
    %v184 = vunpack.c.l.b16 %v69
    %v185 = vunpack.c.h.b16 %v69
    %v186 = vunpack.c.l.b16 %v70
    %v187 = vunpack.c.h.b16 %v70
    %v188 = vunpack.c.l.b16 %v71
    %v189 = vunpack.c.h.b16 %v71
    %v190 = vunpack.c.l.b16 %v72
    %v191 = vunpack.c.h.b16 %v72
    %v192 = vpack.c.b16 %v178, %v176
    %v193 = vpack.c.b16 %v179, %v177
    %v194 = vpack.c.b16 %v182, %v180
    %v195 = vpack.c.b16 %v183, %v181
    %v196 = vpack.c.b16 %v186, %v184
    %v197 = vpack.c.b16 %v187, %v185
    %v198 = vpack.c.b16 %v190, %v188
    %v199 = vpack.c.b16 %v191, %v189
    %v209 = vsel %vm121, %v51, 0
    %211 = vmatprep.subr.bf16.mxu0 %v193
    %212 = vmatpush1.bf16.msra.mxu0 %v192
    %213 = vmatprep.subr.bf16.mxu0 %v195
    %214 = vmatpush1.bf16.msra.mxu0 %v194
    %215 = vmatprep.subr.bf16.mxu0 %v197
    %216 = vmatpush1.bf16.msra.mxu0 %v196
    %217 = vmatprep.subr.bf16.mxu0 %v199
    %218 = vmatpush1.bf16.msra.mxu0 %v198
    %219 = vmatprep.subr.bf16.mxu0 0
    %220 = vmatpush1.bf16.msra.mxu0 0
    %221 = vmatprep.subr.bf16.mxu0 0
    %222 = vmatpush1.bf16.msra.mxu0 0
    %223 = vmatprep.subr.bf16.mxu0 0
    %224 = vmatpush1.bf16.msra.mxu0 0
    %225 = vmatprep.subr.bf16.mxu0 0
    %226 = vmatpush1.bf16.msra.mxu0 0
    %227 = vmatprep.subr.bf16.mxu0 0
    %228 = vmatpush1.bf16.msra.mxu0 0
    %229 = vmatprep.subr.bf16.mxu0 0
    %230 = vmatpush1.bf16.msra.mxu0 0
    %231 = vmatprep.subr.bf16.mxu0 0
    %232 = vmatpush1.bf16.msra.mxu0 0
    %233 = vmatprep.subr.bf16.mxu0 0
    %234 = vmatpush1.bf16.msra.mxu0 0
    %235 = vmatprep.subr.bf16.mxu0 0
    %236 = vmatpush1.bf16.msra.mxu0 0
    %237 = vmatprep.subr.bf16.mxu0 0
    %238 = vmatpush1.bf16.msra.mxu0 0
    %239 = vmatprep.subr.bf16.mxu0 0
    %240 = vmatpush1.bf16.msra.mxu0 0
    %241 = vmatprep.subr.bf16.mxu0 0
    %242 = vmatpush1.bf16.msra.mxu0 0
    %243 = vmatprep.mubr.bf16.mxu0 0
    %244 = vmatmul.mubr.bf16.gmra.mrb[0].mxu0 %v209
    %v245 = vpop.f32.mrb[0].mxu0
    %v246 = vadd.f32 %v160, %v245
    %v247 = vpop.f32.mrb[0].mxu0
    %v248 = vadd.f32 %v162, %v247
    %v249 = vpop.f32.mrb[0].mxu0
    %v250 = vadd.f32 %v164, %v249
    %v251 = vpop.f32.mrb[0].mxu0
    %v252 = vadd.f32 %v166, %v251
    %253 = vdwg.mxu0
    %v254 = vld [vmem:[%s2] sm:$0x3f]
    %255 = vset.pattern.permute.xlu0 0
    %256 = vperm.xlu0 %255, %v254
    %v257 = vpop.permute.xlu0 %256
    %vm258 = vcmp.eq.s32.totalorder %v257, %v38
    %v259 = vsel %vm258, 1.0, 0.0
    %v261 = vrot.slane %v259, 2
    %v263 = vadd.f32 %v259, %v261
    %v264 = vrot.slane %v259, 4
    %v266 = vadd.f32 %v263, %v264
    %v267 = vld [vmem:[%s6] sm:$0x3]
    %v268 = vld [vmem:[%s5] sm:$0xff]
    %v269 = vld [vmem:[%s5 + $0x8] sm:$0xff]
    %v270 = vld [vmem:[%s5 + $0x10] sm:$0xff]
    %v271 = vld [vmem:[%s5 + $0x18] sm:$0xff]
    %v272 = vld [vmem:[%s5 + $0x20] sm:$0xff]
    %v273 = vld [vmem:[%s5 + $0x28] sm:$0xff]
    %v274 = vld [vmem:[%s5 + $0x30] sm:$0xff]
    %v275 = vld [vmem:[%s5 + $0x38] sm:$0xff]
    %v276 = vld [vmem:[%s5 + $0x40] sm:$0xff]
    %v277 = vld [vmem:[%s5 + $0x48] sm:$0xff]
    %v278 = vld [vmem:[%s5 + $0x50] sm:$0xff]
    %v279 = vld [vmem:[%s5 + $0x58] sm:$0xff]
    %v280 = vld [vmem:[%s5 + $0x60] sm:$0xff]
    %v281 = vld [vmem:[%s5 + $0x68] sm:$0xff]
    %v282 = vld [vmem:[%s5 + $0x70] sm:$0xff]
    %v283 = vld [vmem:[%s5 + $0x78] sm:$0xff]
    %v285 = vsel %vm121, %v266, 0
    %287 = vmatprep.subr.mxu0 %v269
    %288 = vmatpush1.msra.mxu0 %v268
    %289 = vmatprep.subr.mxu0 %v271
    %290 = vmatpush1.msra.mxu0 %v270
    %291 = vmatprep.subr.mxu0 %v273
    %292 = vmatpush1.msra.mxu0 %v272
    %293 = vmatprep.subr.mxu0 %v275
    %294 = vmatpush1.msra.mxu0 %v274
    %295 = vmatprep.subr.mxu0 %v277
    %296 = vmatpush1.msra.mxu0 %v276
    %297 = vmatprep.subr.mxu0 %v279
    %298 = vmatpush1.msra.mxu0 %v278
    %299 = vmatprep.subr.mxu0 %v281
    %300 = vmatpush1.msra.mxu0 %v280
    %301 = vmatprep.subr.mxu0 %v283
    %302 = vmatpush1.msra.mxu0 %v282
    %303 = vmatprep.subr.mxu0 0.0
    %304 = vmatpush1.msra.mxu0 0.0
    %305 = vmatprep.subr.mxu0 0.0
    %306 = vmatpush1.msra.mxu0 0.0
    %307 = vmatprep.subr.mxu0 0.0
    %308 = vmatpush1.msra.mxu0 0.0
    %309 = vmatprep.subr.mxu0 0.0
    %310 = vmatpush1.msra.mxu0 0.0
    %311 = vmatprep.subr.mxu0 0.0
    %312 = vmatpush1.msra.mxu0 0.0
    %313 = vmatprep.subr.mxu0 0.0
    %314 = vmatpush1.msra.mxu0 0.0
    %315 = vmatprep.subr.mxu0 0.0
    %316 = vmatpush1.msra.mxu0 0.0
    %317 = vmatprep.subr.mxu0 0.0
    %318 = vmatpush1.msra.mxu0 0.0
    %319 = vmatprep.subr.mxu0 0.0
    %320 = vmatpush1.msra.mxu0 0.0
    %321 = vmatprep.subr.mxu0 0.0
    %322 = vmatpush1.msra.mxu0 0.0
    %323 = vmatprep.subr.mxu0 0.0
    %324 = vmatpush1.msra.mxu0 0.0
    %325 = vmatprep.subr.mxu0 0.0
    %326 = vmatpush1.msra.mxu0 0.0
    %327 = vmatprep.subr.mxu0 0.0
    %328 = vmatpush1.msra.mxu0 0.0
    %329 = vmatprep.subr.mxu0 0.0
    %330 = vmatpush1.msra.mxu0 0.0
    %331 = vmatprep.subr.mxu0 0.0
    %332 = vmatpush1.msra.mxu0 0.0
    %333 = vmatprep.subr.mxu0 0.0
    %334 = vmatpush1.msra.mxu0 0.0
    %335 = vmatprep.subr.mxu0 0.0
    %336 = vmatpush1.msra.mxu0 0.0
    %337 = vmatprep.subr.mxu0 0.0
    %338 = vmatpush1.msra.mxu0 0.0
    %339 = vmatprep.subr.mxu0 0.0
    %340 = vmatpush1.msra.mxu0 0.0
    %341 = vmatprep.subr.mxu0 0.0
    %342 = vmatpush1.msra.mxu0 0.0
    %343 = vmatprep.subr.mxu0 0.0
    %344 = vmatpush1.msra.mxu0 0.0
    %345 = vmatprep.subr.mxu0 0.0
    %346 = vmatpush1.msra.mxu0 0.0
    %347 = vmatprep.subr.mxu0 0.0
    %348 = vmatpush1.msra.mxu0 0.0
    %349 = vmatprep.subr.mxu0 0.0
    %350 = vmatpush1.msra.mxu0 0.0
    %351 = vmatprep.mubr.f32.mxu0 0.0
    %352 = vmatmul.mubr.f32.gmra.mrb[0].mxu0 %v285
    %v353 = vpop.f32.mrb[0].mxu0
    %v354 = vadd.f32 0.0, %v353
    %v355 = vpop.f32.mrb[0].mxu0
    %v356 = vadd.f32 0.0, %v355
    %357 = vdwg.mxu0
    %v358 = vmul.f32 %v354, 0.33333334
    %v359 = vmul.f32 %v356, 0.33333334
    %v361 = vlaneseq
    %v362 = vshrl.u32 %v361, 7
    %v363 = vsub.s32 0, %v362
    %v364 = vrot.slane %v267, %v363
    %v365 = vlaneseq
    %v366 = vshrl.u32 %v365, 7
    %v367 = vsub.s32 1, %v366
    %v368 = vrot.slane %v267, %v367
    %v371 = vadd.f32 %v364, %v358
    %v372 = vadd.f32 %v368, %v359
    %v373 = vadd.s32 %v38, 128
    %vm374 = vcmp.ge.s32.totalorder %v38, 128
    %vm375 = vcmp.ge.s32.totalorder %v373, 128
    %vm376 = vcmp.lt.s32.totalorder %v38, 192
    %vm377 = vcmp.lt.s32.totalorder %v373, 192
    %vm378 = vmand %vm374, %vm376
    %vm379 = vmand %vm375, %vm377
    %v380 = vsel %vm378, 1.0, 0.5
    %v381 = vsel %vm379, 1.0, 0.5
    %v382 = vsel %vm378, 0.0, 0.5
    %v383 = vsel %vm379, 0.0, 0.5
    %v384 = vadd.f32 %v246, %v371
    %v385 = vadd.f32 %v248, %v372
    %v388 = vrot.slane %v371, 6
    %v389 = vrot.slane %v372, 6
    %v392 = vadd.f32 %v246, %v388
    %v393 = vadd.f32 %v248, %v389
    %v394 = vrot.slane %v371, 4
    %v395 = vrot.slane %v372, 4
    %v398 = vadd.f32 %v246, %v394
    %v399 = vadd.f32 %v248, %v395
    %v400 = vrot.slane %v371, 2
    %v401 = vrot.slane %v372, 2
    %v404 = vadd.f32 %v246, %v400
    %v405 = vadd.f32 %v248, %v401
    %v406 = vadd.f32 %v250, %v371
    %v407 = vadd.f32 %v252, %v372
    %v408 = vadd.f32 %v250, %v388
    %v409 = vadd.f32 %v252, %v389
    %v410 = vadd.f32 %v250, %v394
    %v411 = vadd.f32 %v252, %v395
    %v412 = vadd.f32 %v250, %v400
    %v413 = vadd.f32 %v252, %v401
    %v414 = vld [vmem:[%s7] sm:$0xff]
    %v415 = vld [vmem:[%s7 + $0x8] sm:$0xff]
    %v416 = vld [vmem:[%s7 + $0x10] sm:$0xff]
    %v417 = vld [vmem:[%s7 + $0x18] sm:$0xff]
    %v418 = vld [vmem:[%s7 + $0x20] sm:$0xff]
    %v419 = vld [vmem:[%s7 + $0x28] sm:$0xff]
    %v420 = vld [vmem:[%s7 + $0x30] sm:$0xff]
    %v421 = vld [vmem:[%s7 + $0x38] sm:$0xff]
    %v430 = vunpack.c.l.b16 %v414
    %v431 = vunpack.c.h.b16 %v414
    %v432 = vunpack.c.l.b16 %v415
    %v433 = vunpack.c.h.b16 %v415
    %v434 = vunpack.c.l.b16 %v416
    %v435 = vunpack.c.h.b16 %v416
    %v436 = vunpack.c.l.b16 %v417
    %v437 = vunpack.c.h.b16 %v417
    %v438 = vunpack.c.l.b16 %v418
    %v439 = vunpack.c.h.b16 %v418
    %v440 = vunpack.c.l.b16 %v419
    %v441 = vunpack.c.h.b16 %v419
    %v442 = vunpack.c.l.b16 %v420
    %v443 = vunpack.c.h.b16 %v420
    %v444 = vunpack.c.l.b16 %v421
    %v445 = vunpack.c.h.b16 %v421
    %v446 = vpack.c.b16 %v432, %v430
    %v447 = vpack.c.b16 %v433, %v431
    %v448 = vpack.c.b16 %v436, %v434
    %v449 = vpack.c.b16 %v437, %v435
    %v450 = vpack.c.b16 %v440, %v438
    %v451 = vpack.c.b16 %v441, %v439
    %v452 = vpack.c.b16 %v444, %v442
    %v453 = vpack.c.b16 %v445, %v443
    %v463 = vsel %vm121, 0, 0
    %465 = vmatprep.subr.bf16.mxu0 %v447
    %466 = vmatpush1.bf16.msra.mxu0 %v446
    %467 = vmatprep.subr.bf16.mxu0 %v449
    %468 = vmatpush1.bf16.msra.mxu0 %v448
    %469 = vmatprep.subr.bf16.mxu0 %v451
    %470 = vmatpush1.bf16.msra.mxu0 %v450
    %471 = vmatprep.subr.bf16.mxu0 %v453
    %472 = vmatpush1.bf16.msra.mxu0 %v452
    %473 = vmatprep.subr.bf16.mxu0 0
    %474 = vmatpush1.bf16.msra.mxu0 0
    %475 = vmatprep.subr.bf16.mxu0 0
    %476 = vmatpush1.bf16.msra.mxu0 0
    %477 = vmatprep.subr.bf16.mxu0 0
    %478 = vmatpush1.bf16.msra.mxu0 0
    %479 = vmatprep.subr.bf16.mxu0 0
    %480 = vmatpush1.bf16.msra.mxu0 0
    %481 = vmatprep.subr.bf16.mxu0 0
    %482 = vmatpush1.bf16.msra.mxu0 0
    %483 = vmatprep.subr.bf16.mxu0 0
    %484 = vmatpush1.bf16.msra.mxu0 0
    %485 = vmatprep.subr.bf16.mxu0 0
    %486 = vmatpush1.bf16.msra.mxu0 0
    %487 = vmatprep.subr.bf16.mxu0 0
    %488 = vmatpush1.bf16.msra.mxu0 0
    %489 = vmatprep.subr.bf16.mxu0 0
    %490 = vmatpush1.bf16.msra.mxu0 0
    %491 = vmatprep.subr.bf16.mxu0 0
    %492 = vmatpush1.bf16.msra.mxu0 0
    %493 = vmatprep.subr.bf16.mxu0 0
    %494 = vmatpush1.bf16.msra.mxu0 0
    %495 = vmatprep.subr.bf16.mxu0 0
    %496 = vmatpush1.bf16.msra.mxu0 0
    %497 = vmatprep.mubr.bf16.mxu0 0
    %498 = vmatmul.mubr.bf16.gmra.mrb[0].mxu0 %v463
    %v499 = vpop.f32.mrb[0].mxu0
    %v500 = vadd.f32 0.0, %v499
    %v501 = vpop.f32.mrb[0].mxu0
    %v502 = vadd.f32 0.0, %v501
    %v503 = vpop.f32.mrb[0].mxu0
    %v504 = vpop.f32.mrb[0].mxu0
    %505 = vdwg.mxu0
    %v506 = vadd.f32 %v384, %v500
    %v507 = vadd.f32 %v385, %v502
    %v508 = vmul.f32 %v380, %v506
    %v509 = vmul.f32 %v381, %v507
    %v510 = vtanh.pop %v508
    %v511 = vtanh.pop %v509
    %v512 = vmul.f32 %v380, %v510
    %v513 = vmul.f32 %v381, %v511
    %v514 = vadd.f32 %v512, %v382
    %v515 = vadd.f32 %v513, %v383
    %v516 = vmul.f32 %v514, 0.0
    %v517 = vmul.f32 %v514, %v515
    %519 = vrot.lane.b32.xlu0 %v517, 64
    %v520 = vpop.permute.xlu0 %519
    %v522 = vadd.f32 %v516, %v520
    %v523 = vtanh.pop %v522
    %v524 = vmul.f32 %v515, %v523
    %v525 = vpack.c.bf16 %v524, %v524
    %527 = vrot.lane.b32.xlu0 %v525, 64
    %v528 = vpop.permute.xlu0 %527
    %v530 = vsel %vm121, %v528, 0
    %532 = vmatprep.subr.bf16.mxu0 %v447
    %533 = vmatpush1.bf16.msra.mxu0 %v446
    %534 = vmatprep.subr.bf16.mxu0 %v449
    %535 = vmatpush1.bf16.msra.mxu0 %v448
    %536 = vmatprep.subr.bf16.mxu0 %v451
    %537 = vmatpush1.bf16.msra.mxu0 %v450
    %538 = vmatprep.subr.bf16.mxu0 %v453
    %539 = vmatpush1.bf16.msra.mxu0 %v452
    %540 = vmatprep.subr.bf16.mxu0 0
    %541 = vmatpush1.bf16.msra.mxu0 0
    %542 = vmatprep.subr.bf16.mxu0 0
    %543 = vmatpush1.bf16.msra.mxu0 0
    %544 = vmatprep.subr.bf16.mxu0 0
    %545 = vmatpush1.bf16.msra.mxu0 0
    %546 = vmatprep.subr.bf16.mxu0 0
    %547 = vmatpush1.bf16.msra.mxu0 0
    %548 = vmatprep.subr.bf16.mxu0 0
    %549 = vmatpush1.bf16.msra.mxu0 0
    %550 = vmatprep.subr.bf16.mxu0 0
    %551 = vmatpush1.bf16.msra.mxu0 0
    %552 = vmatprep.subr.bf16.mxu0 0
    %553 = vmatpush1.bf16.msra.mxu0 0
    %554 = vmatprep.subr.bf16.mxu0 0
    %555 = vmatpush1.bf16.msra.mxu0 0
    %556 = vmatprep.subr.bf16.mxu0 0
    %557 = vmatpush1.bf16.msra.mxu0 0
    %558 = vmatprep.subr.bf16.mxu0 0
    %559 = vmatpush1.bf16.msra.mxu0 0
    %560 = vmatprep.subr.bf16.mxu0 0
    %561 = vmatpush1.bf16.msra.mxu0 0
    %562 = vmatprep.subr.bf16.mxu0 0
    %563 = vmatpush1.bf16.msra.mxu0 0
    %564 = vmatprep.mubr.bf16.mxu0 0
    %565 = vmatmul.mubr.bf16.gmra.mrb[0].mxu0 %v530
    %v566 = vpop.f32.mrb[0].mxu0
    %v567 = vadd.f32 0.0, %v566
    %v568 = vpop.f32.mrb[0].mxu0
    %v569 = vadd.f32 0.0, %v568
    %v570 = vpop.f32.mrb[0].mxu0
    %v571 = vpop.f32.mrb[0].mxu0
    %572 = vdwg.mxu0
    %v575 = vrot.slane %v567, 6
    %v576 = vrot.slane %v569, 6
    %v579 = vadd.f32 %v392, %v575
    %v580 = vadd.f32 %v393, %v576
    %v581 = vmul.f32 %v380, %v579
    %v582 = vmul.f32 %v381, %v580
    %v583 = vtanh.pop %v581
    %v584 = vtanh.pop %v582
    %v585 = vmul.f32 %v380, %v583
    %v586 = vmul.f32 %v381, %v584
    %v587 = vadd.f32 %v585, %v382
    %v588 = vadd.f32 %v586, %v383
    %v590 = vrot.slane %v522, 6
    %v592 = vmul.f32 %v587, %v590
    %v593 = vmul.f32 %v587, %v588
    %595 = vrot.lane.b32.xlu0 %v593, 64
    %v596 = vpop.permute.xlu0 %595
    %v598 = vadd.f32 %v592, %v596
    %v599 = vtanh.pop %v598
    %v600 = vmul.f32 %v588, %v599
    %v601 = vpack.c.bf16 %v600, %v600
    %v603 = vrot.slane %v601, 1
    %604 = vrot.lane.b32.xlu0 %v603, 64
    %v605 = vpop.permute.xlu0 %604
    %v607 = vsel %vm121, %v605, 0
    %609 = vmatprep.subr.bf16.mxu0 %v447
    %610 = vmatpush1.bf16.msra.mxu0 %v446
    %611 = vmatprep.subr.bf16.mxu0 %v449
    %612 = vmatpush1.bf16.msra.mxu0 %v448
    %613 = vmatprep.subr.bf16.mxu0 %v451
    %614 = vmatpush1.bf16.msra.mxu0 %v450
    %615 = vmatprep.subr.bf16.mxu0 %v453
    %616 = vmatpush1.bf16.msra.mxu0 %v452
    %617 = vmatprep.subr.bf16.mxu0 0
    %618 = vmatpush1.bf16.msra.mxu0 0
    %619 = vmatprep.subr.bf16.mxu0 0
    %620 = vmatpush1.bf16.msra.mxu0 0
    %621 = vmatprep.subr.bf16.mxu0 0
    %622 = vmatpush1.bf16.msra.mxu0 0
    %623 = vmatprep.subr.bf16.mxu0 0
    %624 = vmatpush1.bf16.msra.mxu0 0
    %625 = vmatprep.subr.bf16.mxu0 0
    %626 = vmatpush1.bf16.msra.mxu0 0
    %627 = vmatprep.subr.bf16.mxu0 0
    %628 = vmatpush1.bf16.msra.mxu0 0
    %629 = vmatprep.subr.bf16.mxu0 0
    %630 = vmatpush1.bf16.msra.mxu0 0
    %631 = vmatprep.subr.bf16.mxu0 0
    %632 = vmatpush1.bf16.msra.mxu0 0
    %633 = vmatprep.subr.bf16.mxu0 0
    %634 = vmatpush1.bf16.msra.mxu0 0
    %635 = vmatprep.subr.bf16.mxu0 0
    %636 = vmatpush1.bf16.msra.mxu0 0
    %637 = vmatprep.subr.bf16.mxu0 0
    %638 = vmatpush1.bf16.msra.mxu0 0
    %639 = vmatprep.subr.bf16.mxu0 0
    %640 = vmatpush1.bf16.msra.mxu0 0
    %641 = vmatprep.mubr.bf16.mxu0 0
    %642 = vmatmul.mubr.bf16.gmra.mrb[0].mxu0 %v607
    %v643 = vpop.f32.mrb[0].mxu0
    %v644 = vadd.f32 0.0, %v643
    %v645 = vpop.f32.mrb[0].mxu0
    %v646 = vadd.f32 0.0, %v645
    %v647 = vpop.f32.mrb[0].mxu0
    %v648 = vpop.f32.mrb[0].mxu0
    %649 = vdwg.mxu0
    %v652 = vrot.slane %v644, 4
    %v653 = vrot.slane %v646, 4
    %v656 = vadd.f32 %v398, %v652
    %v657 = vadd.f32 %v399, %v653
    %v658 = vmul.f32 %v380, %v656
    %v659 = vmul.f32 %v381, %v657
    %v660 = vtanh.pop %v658
    %v661 = vtanh.pop %v659
    %v662 = vmul.f32 %v380, %v660
    %v663 = vmul.f32 %v381, %v661
    %v664 = vadd.f32 %v662, %v382
    %v665 = vadd.f32 %v663, %v383
    %v667 = vrot.slane %v598, 6
    %v669 = vmul.f32 %v664, %v667
    %v670 = vmul.f32 %v664, %v665
    %672 = vrot.lane.b32.xlu0 %v670, 64
    %v673 = vpop.permute.xlu0 %672
    %v675 = vadd.f32 %v669, %v673
    %v676 = vtanh.pop %v675
    %v677 = vmul.f32 %v665, %v676
    %v678 = vpack.c.bf16 %v677, %v677
    %v680 = vrot.slane %v678, 2
    %681 = vrot.lane.b32.xlu0 %v680, 64
    %v682 = vpop.permute.xlu0 %681
    %v684 = vsel %vm121, %v682, 0
    %686 = vmatprep.subr.bf16.mxu0 %v447
    %687 = vmatpush1.bf16.msra.mxu0 %v446
    %688 = vmatprep.subr.bf16.mxu0 %v449
    %689 = vmatpush1.bf16.msra.mxu0 %v448
    %690 = vmatprep.subr.bf16.mxu0 %v451
    %691 = vmatpush1.bf16.msra.mxu0 %v450
    %692 = vmatprep.subr.bf16.mxu0 %v453
    %693 = vmatpush1.bf16.msra.mxu0 %v452
    %694 = vmatprep.subr.bf16.mxu0 0
    %695 = vmatpush1.bf16.msra.mxu0 0
    %696 = vmatprep.subr.bf16.mxu0 0
    %697 = vmatpush1.bf16.msra.mxu0 0
    %698 = vmatprep.subr.bf16.mxu0 0
    %699 = vmatpush1.bf16.msra.mxu0 0
    %700 = vmatprep.subr.bf16.mxu0 0
    %701 = vmatpush1.bf16.msra.mxu0 0
    %702 = vmatprep.subr.bf16.mxu0 0
    %703 = vmatpush1.bf16.msra.mxu0 0
    %704 = vmatprep.subr.bf16.mxu0 0
    %705 = vmatpush1.bf16.msra.mxu0 0
    %706 = vmatprep.subr.bf16.mxu0 0
    %707 = vmatpush1.bf16.msra.mxu0 0
    %708 = vmatprep.subr.bf16.mxu0 0
    %709 = vmatpush1.bf16.msra.mxu0 0
    %710 = vmatprep.subr.bf16.mxu0 0
    %711 = vmatpush1.bf16.msra.mxu0 0
    %712 = vmatprep.subr.bf16.mxu0 0
    %713 = vmatpush1.bf16.msra.mxu0 0
    %714 = vmatprep.subr.bf16.mxu0 0
    %715 = vmatpush1.bf16.msra.mxu0 0
    %716 = vmatprep.subr.bf16.mxu0 0
    %717 = vmatpush1.bf16.msra.mxu0 0
    %718 = vmatprep.mubr.bf16.mxu0 0
    %719 = vmatmul.mubr.bf16.gmra.mrb[0].mxu0 %v684
    %v720 = vpop.f32.mrb[0].mxu0
    %v721 = vadd.f32 0.0, %v720
    %v722 = vpop.f32.mrb[0].mxu0
    %v723 = vadd.f32 0.0, %v722
    %v724 = vpop.f32.mrb[0].mxu0
    %v725 = vpop.f32.mrb[0].mxu0
    %726 = vdwg.mxu0
    %v729 = vrot.slane %v721, 2
    %v730 = vrot.slane %v723, 2
    %v733 = vadd.f32 %v404, %v729
    %v734 = vadd.f32 %v405, %v730
    %v735 = vmul.f32 %v380, %v733
    %v736 = vmul.f32 %v381, %v734
    %v737 = vtanh.pop %v735
    %v738 = vtanh.pop %v736
    %v739 = vmul.f32 %v380, %v737
    %v740 = vmul.f32 %v381, %v738
    %v741 = vadd.f32 %v739, %v382
    %v742 = vadd.f32 %v740, %v383
    %v744 = vrot.slane %v675, 6
    %v746 = vmul.f32 %v741, %v744
    %v747 = vmul.f32 %v741, %v742
    %749 = vrot.lane.b32.xlu0 %v747, 64
    %v750 = vpop.permute.xlu0 %749
    %v752 = vadd.f32 %v746, %v750
    %v753 = vtanh.pop %v752
    %v754 = vmul.f32 %v742, %v753
    %v755 = vpack.c.bf16 %v754, %v754
    %v757 = vrot.slane %v755, 3
    %758 = vrot.lane.b32.xlu0 %v757, 64
    %v759 = vpop.permute.xlu0 %758
    %v761 = vsel %vm121, %v759, 0
    %763 = vmatprep.subr.bf16.mxu0 %v447
    %764 = vmatpush1.bf16.msra.mxu0 %v446
    %765 = vmatprep.subr.bf16.mxu0 %v449
    %766 = vmatpush1.bf16.msra.mxu0 %v448
    %767 = vmatprep.subr.bf16.mxu0 %v451
    %768 = vmatpush1.bf16.msra.mxu0 %v450
    %769 = vmatprep.subr.bf16.mxu0 %v453
    %770 = vmatpush1.bf16.msra.mxu0 %v452
    %771 = vmatprep.subr.bf16.mxu0 0
    %772 = vmatpush1.bf16.msra.mxu0 0
    %773 = vmatprep.subr.bf16.mxu0 0
    %774 = vmatpush1.bf16.msra.mxu0 0
    %775 = vmatprep.subr.bf16.mxu0 0
    %776 = vmatpush1.bf16.msra.mxu0 0
    %777 = vmatprep.subr.bf16.mxu0 0
    %778 = vmatpush1.bf16.msra.mxu0 0
    %779 = vmatprep.subr.bf16.mxu0 0
    %780 = vmatpush1.bf16.msra.mxu0 0
    %781 = vmatprep.subr.bf16.mxu0 0
    %782 = vmatpush1.bf16.msra.mxu0 0
    %783 = vmatprep.subr.bf16.mxu0 0
    %784 = vmatpush1.bf16.msra.mxu0 0
    %785 = vmatprep.subr.bf16.mxu0 0
    %786 = vmatpush1.bf16.msra.mxu0 0
    %787 = vmatprep.subr.bf16.mxu0 0
    %788 = vmatpush1.bf16.msra.mxu0 0
    %789 = vmatprep.subr.bf16.mxu0 0
    %790 = vmatpush1.bf16.msra.mxu0 0
    %791 = vmatprep.subr.bf16.mxu0 0
    %792 = vmatpush1.bf16.msra.mxu0 0
    %793 = vmatprep.subr.bf16.mxu0 0
    %794 = vmatpush1.bf16.msra.mxu0 0
    %795 = vmatprep.mubr.bf16.mxu0 0
    %796 = vmatmul.mubr.bf16.gmra.mrb[0].mxu0 %v761
    %v797 = vpop.f32.mrb[0].mxu0
    %v798 = vadd.f32 0.0, %v797
    %v799 = vpop.f32.mrb[0].mxu0
    %v800 = vadd.f32 0.0, %v799
    %v801 = vpop.f32.mrb[0].mxu0
    %v802 = vpop.f32.mrb[0].mxu0
    %803 = vdwg.mxu0
    %v804 = vadd.f32 %v406, %v798
    %v805 = vadd.f32 %v407, %v800
    %v806 = vmul.f32 %v380, %v804
    %v807 = vmul.f32 %v381, %v805
    %v808 = vtanh.pop %v806
    %v809 = vtanh.pop %v807
    %v810 = vmul.f32 %v380, %v808
    %v811 = vmul.f32 %v381, %v809
    %v812 = vadd.f32 %v810, %v382
    %v813 = vadd.f32 %v811, %v383
    %v815 = vrot.slane %v752, 6
    %v817 = vmul.f32 %v812, %v815
    %v818 = vmul.f32 %v812, %v813
    %820 = vrot.lane.b32.xlu0 %v818, 64
    %v821 = vpop.permute.xlu0 %820
    %v823 = vadd.f32 %v817, %v821
    %v824 = vtanh.pop %v823
    %v825 = vmul.f32 %v813, %v824
    %v826 = vpack.c.bf16 %v825, %v825
    %828 = vrot.lane.b32.xlu0 %v826, 64
    %v829 = vpop.permute.xlu0 %828
    %v831 = vsel %vm121, %v829, 0
    %833 = vmatprep.subr.bf16.mxu0 %v447
    %834 = vmatpush1.bf16.msra.mxu0 %v446
    %835 = vmatprep.subr.bf16.mxu0 %v449
    %836 = vmatpush1.bf16.msra.mxu0 %v448
    %837 = vmatprep.subr.bf16.mxu0 %v451
    %838 = vmatpush1.bf16.msra.mxu0 %v450
    %839 = vmatprep.subr.bf16.mxu0 %v453
    %840 = vmatpush1.bf16.msra.mxu0 %v452
    %841 = vmatprep.subr.bf16.mxu0 0
    %842 = vmatpush1.bf16.msra.mxu0 0
    %843 = vmatprep.subr.bf16.mxu0 0
    %844 = vmatpush1.bf16.msra.mxu0 0
    %845 = vmatprep.subr.bf16.mxu0 0
    %846 = vmatpush1.bf16.msra.mxu0 0
    %847 = vmatprep.subr.bf16.mxu0 0
    %848 = vmatpush1.bf16.msra.mxu0 0
    %849 = vmatprep.subr.bf16.mxu0 0
    %850 = vmatpush1.bf16.msra.mxu0 0
    %851 = vmatprep.subr.bf16.mxu0 0
    %852 = vmatpush1.bf16.msra.mxu0 0
    %853 = vmatprep.subr.bf16.mxu0 0
    %854 = vmatpush1.bf16.msra.mxu0 0
    %855 = vmatprep.subr.bf16.mxu0 0
    %856 = vmatpush1.bf16.msra.mxu0 0
    %857 = vmatprep.subr.bf16.mxu0 0
    %858 = vmatpush1.bf16.msra.mxu0 0
    %859 = vmatprep.subr.bf16.mxu0 0
    %860 = vmatpush1.bf16.msra.mxu0 0
    %861 = vmatprep.subr.bf16.mxu0 0
    %862 = vmatpush1.bf16.msra.mxu0 0
    %863 = vmatprep.subr.bf16.mxu0 0
    %864 = vmatpush1.bf16.msra.mxu0 0
    %865 = vmatprep.mubr.bf16.mxu0 0
    %866 = vmatmul.mubr.bf16.gmra.mrb[0].mxu0 %v831
    %v867 = vpop.f32.mrb[0].mxu0
    %v868 = vadd.f32 0.0, %v867
    %v869 = vpop.f32.mrb[0].mxu0
    %v870 = vadd.f32 0.0, %v869
    %v871 = vpop.f32.mrb[0].mxu0
    %v872 = vpop.f32.mrb[0].mxu0
    %873 = vdwg.mxu0
    %v876 = vrot.slane %v868, 6
    %v877 = vrot.slane %v870, 6
    %v880 = vadd.f32 %v408, %v876
    %v881 = vadd.f32 %v409, %v877
    %v882 = vmul.f32 %v380, %v880
    %v883 = vmul.f32 %v381, %v881
    %v884 = vtanh.pop %v882
    %v885 = vtanh.pop %v883
    %v886 = vmul.f32 %v380, %v884
    %v887 = vmul.f32 %v381, %v885
    %v888 = vadd.f32 %v886, %v382
    %v889 = vadd.f32 %v887, %v383
    %v891 = vrot.slane %v823, 6
    %v893 = vmul.f32 %v888, %v891
    %v894 = vmul.f32 %v888, %v889
    %896 = vrot.lane.b32.xlu0 %v894, 64
    %v897 = vpop.permute.xlu0 %896
    %v899 = vadd.f32 %v893, %v897
    %v900 = vtanh.pop %v899
    %v901 = vmul.f32 %v889, %v900
    %v902 = vpack.c.bf16 %v901, %v901
    %v904 = vrot.slane %v902, 1
    %905 = vrot.lane.b32.xlu0 %v904, 64
    %v906 = vpop.permute.xlu0 %905
    %v908 = vsel %vm121, %v906, 0
    %910 = vmatprep.subr.bf16.mxu0 %v447
    %911 = vmatpush1.bf16.msra.mxu0 %v446
    %912 = vmatprep.subr.bf16.mxu0 %v449
    %913 = vmatpush1.bf16.msra.mxu0 %v448
    %914 = vmatprep.subr.bf16.mxu0 %v451
    %915 = vmatpush1.bf16.msra.mxu0 %v450
    %916 = vmatprep.subr.bf16.mxu0 %v453
    %917 = vmatpush1.bf16.msra.mxu0 %v452
    %918 = vmatprep.subr.bf16.mxu0 0
    %919 = vmatpush1.bf16.msra.mxu0 0
    %920 = vmatprep.subr.bf16.mxu0 0
    %921 = vmatpush1.bf16.msra.mxu0 0
    %922 = vmatprep.subr.bf16.mxu0 0
    %923 = vmatpush1.bf16.msra.mxu0 0
    %924 = vmatprep.subr.bf16.mxu0 0
    %925 = vmatpush1.bf16.msra.mxu0 0
    %926 = vmatprep.subr.bf16.mxu0 0
    %927 = vmatpush1.bf16.msra.mxu0 0
    %928 = vmatprep.subr.bf16.mxu0 0
    %929 = vmatpush1.bf16.msra.mxu0 0
    %930 = vmatprep.subr.bf16.mxu0 0
    %931 = vmatpush1.bf16.msra.mxu0 0
    %932 = vmatprep.subr.bf16.mxu0 0
    %933 = vmatpush1.bf16.msra.mxu0 0
    %934 = vmatprep.subr.bf16.mxu0 0
    %935 = vmatpush1.bf16.msra.mxu0 0
    %936 = vmatprep.subr.bf16.mxu0 0
    %937 = vmatpush1.bf16.msra.mxu0 0
    %938 = vmatprep.subr.bf16.mxu0 0
    %939 = vmatpush1.bf16.msra.mxu0 0
    %940 = vmatprep.subr.bf16.mxu0 0
    %941 = vmatpush1.bf16.msra.mxu0 0
    %942 = vmatprep.mubr.bf16.mxu0 0
    %943 = vmatmul.mubr.bf16.gmra.mrb[0].mxu0 %v908
    %v944 = vpop.f32.mrb[0].mxu0
    %v945 = vadd.f32 0.0, %v944
    %v946 = vpop.f32.mrb[0].mxu0
    %v947 = vadd.f32 0.0, %v946
    %v948 = vpop.f32.mrb[0].mxu0
    %v949 = vpop.f32.mrb[0].mxu0
    %950 = vdwg.mxu0
    %v953 = vrot.slane %v945, 4
    %v954 = vrot.slane %v947, 4
    %v957 = vadd.f32 %v410, %v953
    %v958 = vadd.f32 %v411, %v954
    %v959 = vmul.f32 %v380, %v957
    %v960 = vmul.f32 %v381, %v958
    %v961 = vtanh.pop %v959
    %v962 = vtanh.pop %v960
    %v963 = vmul.f32 %v380, %v961
    %v964 = vmul.f32 %v381, %v962
    %v965 = vadd.f32 %v963, %v382
    %v966 = vadd.f32 %v964, %v383
    %v968 = vrot.slane %v899, 6
    %v970 = vmul.f32 %v965, %v968
    %v971 = vmul.f32 %v965, %v966
    %973 = vrot.lane.b32.xlu0 %v971, 64
    %v974 = vpop.permute.xlu0 %973
    %v976 = vadd.f32 %v970, %v974
    %v977 = vtanh.pop %v976
    %v978 = vmul.f32 %v966, %v977
    %v979 = vpack.c.bf16 %v978, %v978
    %v981 = vrot.slane %v979, 2
    %982 = vrot.lane.b32.xlu0 %v981, 64
    %v983 = vpop.permute.xlu0 %982
    %v985 = vsel %vm121, %v983, 0
    %987 = vmatprep.subr.bf16.mxu0 %v447
    %988 = vmatpush1.bf16.msra.mxu0 %v446
    %989 = vmatprep.subr.bf16.mxu0 %v449
    %990 = vmatpush1.bf16.msra.mxu0 %v448
    %991 = vmatprep.subr.bf16.mxu0 %v451
    %992 = vmatpush1.bf16.msra.mxu0 %v450
    %993 = vmatprep.subr.bf16.mxu0 %v453
    %994 = vmatpush1.bf16.msra.mxu0 %v452
    %995 = vmatprep.subr.bf16.mxu0 0
    %996 = vmatpush1.bf16.msra.mxu0 0
    %997 = vmatprep.subr.bf16.mxu0 0
    %998 = vmatpush1.bf16.msra.mxu0 0
    %999 = vmatprep.subr.bf16.mxu0 0
    %1000 = vmatpush1.bf16.msra.mxu0 0
    %1001 = vmatprep.subr.bf16.mxu0 0
    %1002 = vmatpush1.bf16.msra.mxu0 0
    %1003 = vmatprep.subr.bf16.mxu0 0
    %1004 = vmatpush1.bf16.msra.mxu0 0
    %1005 = vmatprep.subr.bf16.mxu0 0
    %1006 = vmatpush1.bf16.msra.mxu0 0
    %1007 = vmatprep.subr.bf16.mxu0 0
    %1008 = vmatpush1.bf16.msra.mxu0 0
    %1009 = vmatprep.subr.bf16.mxu0 0
    %1010 = vmatpush1.bf16.msra.mxu0 0
    %1011 = vmatprep.subr.bf16.mxu0 0
    %1012 = vmatpush1.bf16.msra.mxu0 0
    %1013 = vmatprep.subr.bf16.mxu0 0
    %1014 = vmatpush1.bf16.msra.mxu0 0
    %1015 = vmatprep.subr.bf16.mxu0 0
    %1016 = vmatpush1.bf16.msra.mxu0 0
    %1017 = vmatprep.subr.bf16.mxu0 0
    %1018 = vmatpush1.bf16.msra.mxu0 0
    %1019 = vmatprep.mubr.bf16.mxu0 0
    %1020 = vmatmul.mubr.bf16.gmra.mrb[0].mxu0 %v985
    %v1021 = vpop.f32.mrb[0].mxu0
    %v1022 = vadd.f32 0.0, %v1021
    %v1023 = vpop.f32.mrb[0].mxu0
    %v1024 = vadd.f32 0.0, %v1023
    %v1025 = vpop.f32.mrb[0].mxu0
    %v1026 = vpop.f32.mrb[0].mxu0
    %1027 = vdwg.mxu0
    %v1030 = vrot.slane %v1022, 2
    %v1031 = vrot.slane %v1024, 2
    %v1034 = vadd.f32 %v412, %v1030
    %v1035 = vadd.f32 %v413, %v1031
    %v1036 = vmul.f32 %v380, %v1034
    %v1037 = vmul.f32 %v381, %v1035
    %v1038 = vtanh.pop %v1036
    %v1039 = vtanh.pop %v1037
    %v1040 = vmul.f32 %v380, %v1038
    %v1041 = vmul.f32 %v381, %v1039
    %v1042 = vadd.f32 %v1040, %v382
    %v1043 = vadd.f32 %v1041, %v383
    %v1045 = vrot.slane %v976, 6
    %v1047 = vmul.f32 %v1042, %v1045
    %v1048 = vmul.f32 %v1042, %v1043
    %1050 = vrot.lane.b32.xlu0 %v1048, 64
    %v1051 = vpop.permute.xlu0 %1050
    %v1053 = vadd.f32 %v1047, %v1051
    %v1054 = vtanh.pop %v1053
    %v1055 = vmul.f32 %v1043, %v1054
    %1057 = vrot.lane.b32.xlu0 %v1055, 96
    %v1058 = vpop.permute.xlu0 %1057
    %v1060 = vadd.f32 %v1055, %v1058
    %v1061 = vld [vmem:[%s8] sm:$0xff]
    %v1062 = vld [vmem:[%s8 + $0x8] sm:$0xff]
    %v1063 = vld [vmem:[%s8 + $0x10] sm:$0xff]
    %v1064 = vld [vmem:[%s8 + $0x18] sm:$0xff]
    %v1065 = vld [vmem:[%s9] sm:$0x1]
    %v1067 = vlaneseq
    %v1068 = vshrl.u32 %v1067, 7
    %v1069 = vsub.s32 0, %v1068
    %v1070 = vrot.slane %v1065, %v1069
    %v1073 = vrot.slane %v1060, 6
    %1074 = vrot.lane.b32.xlu0 %v1073, 64
    %v1075 = vpop.permute.xlu0 %1074
    %vm1076 = vcmask 261120
    %v1077 = vsel %vm1076, %v1075, 0
    %1079 = vmatprep.subr.mxu0 0.0
    %1080 = vmatpush1.msra.mxu0 %v1061
    %1081 = vmatprep.subr.mxu0 0.0
    %1082 = vmatpush1.msra.mxu0 %v1062
    %1083 = vmatprep.subr.mxu0 0.0
    %1084 = vmatpush1.msra.mxu0 %v1063
    %1085 = vmatprep.subr.mxu0 0.0
    %1086 = vmatpush1.msra.mxu0 %v1064
    %1087 = vmatprep.subr.mxu0 0.0
    %1088 = vmatpush1.msra.mxu0 0.0
    %1089 = vmatprep.subr.mxu0 0.0
    %1090 = vmatpush1.msra.mxu0 0.0
    %1091 = vmatprep.subr.mxu0 0.0
    %1092 = vmatpush1.msra.mxu0 0.0
    %1093 = vmatprep.subr.mxu0 0.0
    %1094 = vmatpush1.msra.mxu0 0.0
    %1095 = vmatprep.subr.mxu0 0.0
    %1096 = vmatpush1.msra.mxu0 0.0
    %1097 = vmatprep.subr.mxu0 0.0
    %1098 = vmatpush1.msra.mxu0 0.0
    %1099 = vmatprep.subr.mxu0 0.0
    %1100 = vmatpush1.msra.mxu0 0.0
    %1101 = vmatprep.subr.mxu0 0.0
    %1102 = vmatpush1.msra.mxu0 0.0
    %1103 = vmatprep.subr.mxu0 0.0
    %1104 = vmatpush1.msra.mxu0 0.0
    %1105 = vmatprep.subr.mxu0 0.0
    %1106 = vmatpush1.msra.mxu0 0.0
    %1107 = vmatprep.subr.mxu0 0.0
    %1108 = vmatpush1.msra.mxu0 0.0
    %1109 = vmatprep.subr.mxu0 0.0
    %1110 = vmatpush1.msra.mxu0 0.0
    %1111 = vmatprep.subr.mxu0 0.0
    %1112 = vmatpush1.msra.mxu0 0.0
    %1113 = vmatprep.subr.mxu0 0.0
    %1114 = vmatpush1.msra.mxu0 0.0
    %1115 = vmatprep.subr.mxu0 0.0
    %1116 = vmatpush1.msra.mxu0 0.0
    %1117 = vmatprep.subr.mxu0 0.0
    %1118 = vmatpush1.msra.mxu0 0.0
    %1119 = vmatprep.subr.mxu0 0.0
    %1120 = vmatpush1.msra.mxu0 0.0
    %1121 = vmatprep.subr.mxu0 0.0
    %1122 = vmatpush1.msra.mxu0 0.0
    %1123 = vmatprep.subr.mxu0 0.0
    %1124 = vmatpush1.msra.mxu0 0.0
    %1125 = vmatprep.subr.mxu0 0.0
    %1126 = vmatpush1.msra.mxu0 0.0
    %1127 = vmatprep.subr.mxu0 0.0
    %1128 = vmatpush1.msra.mxu0 0.0
    %1129 = vmatprep.subr.mxu0 0.0
    %1130 = vmatpush1.msra.mxu0 0.0
    %1131 = vmatprep.subr.mxu0 0.0
    %1132 = vmatpush1.msra.mxu0 0.0
    %1133 = vmatprep.subr.mxu0 0.0
    %1134 = vmatpush1.msra.mxu0 0.0
    %1135 = vmatprep.subr.mxu0 0.0
    %1136 = vmatpush1.msra.mxu0 0.0
    %1137 = vmatprep.subr.mxu0 0.0
    %1138 = vmatpush1.msra.mxu0 0.0
    %1139 = vmatprep.subr.mxu0 0.0
    %1140 = vmatpush1.msra.mxu0 0.0
    %1141 = vmatprep.subr.mxu0 0.0
    %1142 = vmatpush1.msra.mxu0 0.0
    %1143 = vmatprep.mubr.f32.mxu0 0.0
    %1144 = vmatmul.mubr.f32.gmra.mrb[0].mxu0 %v1077
    %v1145 = vpop.f32.mrb[0].mxu0
    %v1146 = vadd.f32 %v1070, %v1145
    %v1147 = vpop.f32.mrb[0].mxu0
    %1148 = vdwg.mxu0
    %vm1149 = vcmask 17408
    %1150 = vst.msk [vmem:[#allocation2] sm:$0x3] %vm1149, %v1146
    // Predicated region
    $region42: #{tc_lstm_forward.1} parent=1 // pred_check
      _
    $region43: #{tc_lstm_forward.1} parent=1 // pred_check_branch
      %1152 = sbr.rel (0) target = $region45
    $region44: #{tc_lstm_forward.1} parent=1 // pred_region
      %s1154 = ssub.s32 32, 32
      %1155 = vsyncadd [#allocation3], %s1154
      %s1157 = sshll.u32 [#allocation2], 4
      %s1158 = int_to_ptr.vmem [resolvable:$true] %s1157
      %1160 = dma.vmem_to_hbm [thread:$0]  %s1158, 32, %s10, [#allocation3]
    $region45: #{tc_lstm_forward.1} parent=1 // pred_fallthru
      _
    // Predicated region
    $region46: #{tc_lstm_forward.1} parent=1 // pred_check
      _
    $region47: #{tc_lstm_forward.1} parent=1 // pred_check_branch
      %1162 = sbr.rel (0) target = $region49
    $region48: #{tc_lstm_forward.1} parent=1 // pred_region
      %1163 = dma.done [#allocation3], 32
    $region49: #{tc_lstm_forward.1} parent=1 // pred_fallthru
      _
    %1164 = vsyncpa [#allocation3], 1

</llo_original>
